<compile_context>
chip_gen: v7x
topology: tpu7x:2x2x1
jax: 0.10.0
libtpu: 0.0.40
codegen_flags: <defaults>
</compile_context>

<pallas_src>
import functools

import jax
import jax.numpy as jnp
from jax.experimental import pallas as pl
from jax.experimental.pallas import tpu as pltpu


# ---------------------------------------------------------------------------
# Host-side weight-table builders
# ---------------------------------------------------------------------------

def _build_conv_operator(w, H, W):
    """Dense operator M (2*HW, HW) such that

        logits = avg_flat @ M[:HW] + max_flat @ M[HW:]

    equals the 2->1 channel KxK cross-correlation with zero 'same' padding
    (PyTorch nn.Conv2d convention, no bias).  Avg-channel rows come first.
    """
    K = w.shape[-1]
    P = K // 2
    HW = H * W
    i = jnp.arange(HW, dtype=jnp.int32)
    h = i // W
    col = i % W
    w32 = w.astype(jnp.float32)
    M = jnp.zeros((2 * HW, HW), jnp.float32)
    for c in range(2):
        for ky in range(K):
            for kx in range(K):
                dy, dx = ky - P, kx - P
                hs, ws = h + dy, col + dx
                valid = (hs >= 0) & (hs < H) & (ws >= 0) & (ws < W)
                j = jnp.clip(hs, 0, H - 1) * W + jnp.clip(ws, 0, W - 1)
                vals = jnp.where(valid, w32[c, ky, kx], 0.0)
                M = M.at[c * HW + j, i].add(vals)   # invalid taps add 0
    return M


def _build_masked_weight_planes(w, H, W):
    """(2*K*K, HW) planes: tap weight times the zero-'same'-padding validity
    mask of that tap at each output pixel (avg-channel taps first)."""
    K = w.shape[-1]
    P = K // 2
    HW = H * W
    i = jnp.arange(HW, dtype=jnp.int32)
    h = i // W
    col = i % W
    w32 = w.astype(jnp.float32)
    planes = []
    for c in range(2):
        for ky in range(K):
            for kx in range(K):
                dy, dx = ky - P, kx - P
                valid = ((h + dy >= 0) & (h + dy < H) &
                         (col + dx >= 0) & (col + dx < W))
                planes.append(jnp.where(valid, w32[c, ky, kx], 0.0))
    return jnp.stack(planes, axis=0)


# ---------------------------------------------------------------------------
# Kernels
# ---------------------------------------------------------------------------

def _channel_mean_max(x, C, HW):
    """Channel mean/max as (B, HW) f32 planes from the native-dtype block.

    Only the per-channel (B, HW) planes are upcast, so bf16 inputs never get a
    full-block f32 copy; channel planes are static 128-aligned lane slices.
    """
    x0 = x[:, 0:HW].astype(jnp.float32)
    csum = x0
    cmax = x0
    for c in range(1, C):
        xc = x[:, c * HW:(c + 1) * HW].astype(jnp.float32)
        csum = csum + xc
        cmax = jnp.maximum(cmax, xc)
    avg = csum * (1.0 / C)
    return avg, cmax


def _apply_attention(x, att, o_ref, C, HW):
    """out[:, c] = x[:, c] * att, as C lane-dense full-width stores."""
    att = att.astype(o_ref.dtype)
    for c in range(C):
        sl = slice(c * HW, (c + 1) * HW)
        o_ref[:, sl] = x[:, sl] * att


def _sa_mxu_kernel(x_ref, op_ref, o_ref, *, C, HW):
    """MXU path: conv folded into a resident dense (2*HW, HW) operator.

    x_ref : VMEM (B, C*HW)   input block (native dtype, lane-dense)
    op_ref: VMEM (2*HW, HW)  f32 conv operator (avg rows first), resident
    o_ref : VMEM (B, C*HW)   output block
    """
    x = x_ref[...]                                    # one native-dtype load
    avg, cmax = _channel_mean_max(x, C, HW)

    # Two (B, HW) x (HW, HW) MXU matmuls at fp32 contract precision; the zero
    # 'same' padding is already baked into the operator.
    logits = jnp.dot(avg, op_ref[0:HW, :],
                     preferred_element_type=jnp.float32,
                     precision=jax.lax.Precision.HIGHEST)
    logits = logits + jnp.dot(cmax, op_ref[HW:2 * HW, :],
                              preferred_element_type=jnp.float32,
                              precision=jax.lax.Precision.HIGHEST)

    att = jax.nn.sigmoid(logits)                      # (B, HW) f32, EUP
    _apply_attention(x, att, o_ref, C, HW)


def _sa_roll_kernel(x_ref, wm_ref, o_ref, *, C, H, W, K, n_acc=4):
    """Fallback path (large H*W): XLU lane-rolls + masked-weight planes.

    x_ref : VMEM (B, C*HW)     input block
    wm_ref: VMEM (2*K*K, HW)   f32 masked tap weights (avg taps first), resident
    o_ref : VMEM (B, C*HW)     output block
    """
    P = K // 2
    KK = K * K
    HW = H * W
    x = x_ref[...]
    avg, cmax = _channel_mean_max(x, C, HW)
    B = avg.shape[0]

    # Independent partial accumulators so the VALU adds are not one serial
    # dependence chain; rolls run in the XLU slot, MACs in the VPU slot.
    accs = [jnp.zeros((B, HW), jnp.float32) for _ in range(min(n_acc, KK))]
    for t in range(KK):
        ky, kx = divmod(t, K)
        s = (ky - P) * W + (kx - P)                   # flat tap offset
        shift = (-s) % HW
        # Circular lane-roll: rolled[i] == v[(i + s) mod HW]; the zero 'same'
        # padding is encoded in the masked weights, so no per-tap selects.
        a_sh = avg if shift == 0 else pltpu.roll(avg, shift=shift, axis=1)
        m_sh = cmax if shift == 0 else pltpu.roll(cmax, shift=shift, axis=1)
        wa = wm_ref[t:t + 1, :]                       # (1, HW) -> bcast over B
        wx = wm_ref[KK + t:KK + t + 1, :]
        k = t % len(accs)
        accs[k] = accs[k] + a_sh * wa + m_sh * wx

    logits = accs[0]
    for a in accs[1:]:
        logits = logits + a
    att = jax.nn.sigmoid(logits)
    _apply_attention(x, att, o_ref, C, HW)


# ---------------------------------------------------------------------------
# Block-size / VMEM heuristics
# ---------------------------------------------------------------------------

def _vmem_capacity_bytes():
    try:
        cap = getattr(pltpu.get_tpu_info(), "vmem_capacity_bytes", None)
        if cap:
            return int(cap)
    except Exception:
        pass
    return 64 * 1024 * 1024        # conservative floor (v7x: 64 MiB per TC)


def _pick_batch_block(n, per_elem_bytes, resident_bytes, vmem_cap):
    """Batch-block size for the 2-D (N, C*HW) layout.

    Batch is the sublane dim, so a block must be a multiple of 8 or the full
    batch.  Prefers >= 8 grid steps (pipeline steady state and both v7x TCs)
    and a block footprint <= ~8 MiB, while keeping the real working set
    (double-buffered in/out blocks + resident table + temps) within budget.
    """
    sweet_max = 8 * 1024 * 1024
    budget = max(int(vmem_cap * 0.6) - resident_bytes, per_elem_bytes)
    cands = [d for d in range(1, n + 1)
             if n % d == 0 and (d % 8 == 0 or d == n)]
    feasible = [d for d in cands if d * per_elem_bytes <= budget]
    if not feasible:
        # Pathologically large blocks (huge H*W): take the smallest legal one
        # and rely on the scoped-VMEM headroom.
        feasible = [min(cands)]

    def rank(d):
        fp = d * per_elem_bytes
        steps = min(n // d, 8)
        return (steps, fp <= sweet_max, fp if fp <= sweet_max else -fp)

    return max(feasible, key=rank)


# ---------------------------------------------------------------------------
# Wrapper
# ---------------------------------------------------------------------------

def spatial_attention(x, w, *, kernel_size=7, batch_block=None, conv_path=None):
    """SpatialAttention forward.  x: (N, C, H, W); w: (2, K, K) conv weight
    (output channel squeezed, no bias)."""
    N, C, H, W = x.shape
    K = kernel_size
    assert K % 2 == 1, "Kernel size must be odd"
    assert w.shape == (2, K, K)
    HW = H * W

    # Lane-dense 2-D layout: batch on sublanes, channels as 128-aligned lane
    # slabs of width HW (reshape only; no data movement).
    x2d = x.reshape(N, C * HW)

    vmem_cap = _vmem_capacity_bytes()

    # Path selection: dense MXU operator when it comfortably fits VMEM
    # (generation-aware: ~8 MiB on v7x, ~16 MiB on v5e/v6e), else lane-rolls.
    operator_bytes = 2 * HW * HW * 4
    if conv_path is None:
        conv_path = "mxu" if operator_bytes <= vmem_cap // 8 else "roll"

    if conv_path == "mxu":
        table = _build_conv_operator(w, H, W)             # (2*HW, HW) f32
        kernel = functools.partial(_sa_mxu_kernel, C=C, HW=HW)
    else:
        # Note: for very large H*W the (2*K*K, HW) table itself grows; it is
        # still far smaller than the input block, but could be replaced by
        # in-kernel mask computation if resident VMEM ever becomes the limit.
        table = _build_masked_weight_planes(w, H, W)      # (2*K*K, HW) f32
        kernel = functools.partial(_sa_roll_kernel, C=C, H=H, W=W, K=K)
    resident_bytes = int(table.size) * 4

    # Working set per batch element: double-buffered in+out blocks, the
    # native-dtype block held live in the kernel, and ~8 f32 (HW,) temps.
    itemsize = jnp.dtype(x.dtype).itemsize
    per_elem_bytes = 5 * C * HW * itemsize + 8 * HW * 4
    if batch_block is None:
        batch_block = _pick_batch_block(N, per_elem_bytes, resident_bytes,
                                        vmem_cap)
    assert N % batch_block == 0, "batch_block must divide N"
    assert batch_block % 8 == 0 or batch_block == N, (
        "batch_block is the sublane dim: must be a multiple of 8 or the "
        "full batch")
    grid = (N // batch_block,)

    # Generation-aware scoped-VMEM limit: ~48 MiB on v7x (64 MiB physical),
    # ~96 MiB on v5e/v6e (128 MiB physical).
    vmem_limit = int(min(vmem_cap * 3 // 4, 96 * 1024 * 1024))

    out2d = pl.pallas_call(
        kernel,
        out_shape=jax.ShapeDtypeStruct((N, C * HW), x.dtype),
        grid_spec=pltpu.PrefetchScalarGridSpec(
            num_scalar_prefetch=0,
            grid=grid,
            in_specs=[
                pl.BlockSpec((batch_block, C * HW), lambda n: (n, 0)),
                # Weight table: same block every step -> stays resident.
                pl.BlockSpec(table.shape, lambda n: (0, 0)),
            ],
            out_specs=pl.BlockSpec((batch_block, C * HW), lambda n: (n, 0)),
        ),
        compiler_params=pltpu.CompilerParams(
            dimension_semantics=("parallel",),
            vmem_limit_bytes=vmem_limit),
    )(x2d, table)
    return out2d.reshape(N, C, H, W)


# ---------------------------------------------------------------------------
# Reference + test harness
# ---------------------------------------------------------------------------

def _reference(x, w):
    """Pure-JAX reference mirroring the PyTorch forward."""
    avg = jnp.mean(x, axis=1, keepdims=True)
    mx = jnp.max(x, axis=1, keepdims=True)
    out = jnp.concatenate([avg, mx], axis=1)              # (N, 2, H, W)
    pad = w.shape[-1] // 2
    conv = jax.lax.conv_general_dilated(
        out, w[None],                                     # (1, 2, K, K) OIHW
        window_strides=(1, 1),
        padding=[(pad, pad), (pad, pad)],
        dimension_numbers=("NCHW", "OIHW", "NCHW"))
    return x * jax.nn.sigmoid(conv)


if __name__ == "__main__":
    key = jax.random.PRNGKey(0)
    kx, kw = jax.random.split(key)

    N, C, H, W = 2, 4, 16, 16
    K = 7

    x = jax.random.normal(kx, (N, C, H, W), dtype=jnp.float32)

    # Deterministic conv weight init (PyTorch default kaiming_uniform:
    # fan_in = 2 * K * K -> bound = 1/sqrt(fan_in)).
    fan_in = 2 * K * K
    bound = 1.0 / float(fan_in) ** 0.5
    w = jax.random.uniform(kw, (2, K, K), dtype=jnp.float32,
                           minval=-bound, maxval=bound)

    ref = _reference(x, w)

    # Default path at this size: MXU operator.
    out = jax.block_until_ready(spatial_attention(x, w, kernel_size=K))
    assert out.shape == (N, C, H, W)
    err = float(jnp.max(jnp.abs(out - ref)))
    assert err < 1e-5, f"MXU path mismatch vs reference: {err}"

    # Also exercise the roll fallback (used when the dense operator is too big).
    out_roll = jax.block_until_ready(
        spatial_attention(x, w, kernel_size=K, conv_path="roll"))
    err_roll = float(jnp.max(jnp.abs(out_roll - ref)))
    assert err_roll < 1e-5, f"roll path mismatch vs reference: {err_roll}"

    print("KERNEL_OK")
</pallas_src>

<mosaic_0001>
module attributes {stable_mosaic.version = 11 : i64} {
  func.func @_sa_mxu_kernel(%arg0: i32, %arg1: memref<2x1024xf32, #tpu.memory_space<vmem>>, %arg2: memref<512x256xf32, #tpu.memory_space<vmem>>, %arg3: memref<2x1024xf32, #tpu.memory_space<vmem>>) attributes {dimension_semantics = [#tpu.dimension_semantics<parallel>], iteration_bounds = array<i64: 1>, scalar_prefetch = 0 : i64, scratch_operands = 0 : i64, tpu.core_type = #tpu.core_type<tc>, window_params = [{transform_indices = @transform_0, window_bounds = array<i64: 2, 1024>}, {pipeline_mode = #tpu.pipeline_mode<synchronous>, transform_indices = @transform_1, window_bounds = array<i64: 512, 256>}, {transform_indices = @transform_2, window_bounds = array<i64: 2, 1024>}]} {
    %c0 = arith.constant 0 : index
    %c0_0 = arith.constant 0 : index
    %0 = vector.load %arg1[%c0, %c0_0] : memref<2x1024xf32, #tpu.memory_space<vmem>>, vector<2x1024xf32>
    %1 = vector.extract_strided_slice %0 {offsets = [0, 0], sizes = [2, 256], strides = [1, 1]} : vector<2x1024xf32> to vector<2x256xf32>
    %2 = vector.extract_strided_slice %0 {offsets = [0, 256], sizes = [2, 256], strides = [1, 1]} : vector<2x1024xf32> to vector<2x256xf32>
    %3 = arith.addf %1, %2 : vector<2x256xf32>
    %4 = arith.maximumf %1, %2 : vector<2x256xf32>
    %5 = vector.extract_strided_slice %0 {offsets = [0, 512], sizes = [2, 256], strides = [1, 1]} : vector<2x1024xf32> to vector<2x256xf32>
    %6 = arith.addf %3, %5 : vector<2x256xf32>
    %7 = arith.maximumf %4, %5 : vector<2x256xf32>
    %8 = vector.extract_strided_slice %0 {offsets = [0, 768], sizes = [2, 256], strides = [1, 1]} : vector<2x1024xf32> to vector<2x256xf32>
    %9 = arith.addf %6, %8 : vector<2x256xf32>
    %10 = arith.maximumf %7, %8 : vector<2x256xf32>
    %cst = arith.constant 2.500000e-01 : f32
    %11 = vector.broadcast %cst : f32 to vector<2x256xf32>
    %12 = arith.mulf %9, %11 : vector<2x256xf32>
    %c0_1 = arith.constant 0 : index
    %c0_2 = arith.constant 0 : index
    %13 = vector.load %arg2[%c0_1, %c0_2] : memref<512x256xf32, #tpu.memory_space<vmem>>, vector<256x256xf32>
    %cst_3 = arith.constant dense<0.000000e+00> : vector<2x256xf32>
    %14 = tpu.matmul %12, %13, %cst_3 {dimension_numbers = #tpu.dot_dimension_numbers<[1], [0], [0], [1], [0, 0, 1, 1], [], []>, precision = #tpu.contract_precision<fp32>} : vector<2x256xf32>, vector<256x256xf32>, vector<2x256xf32> -> vector<2x256xf32>
    %c256 = arith.constant 256 : index
    %c0_4 = arith.constant 0 : index
    %15 = vector.load %arg2[%c256, %c0_4] : memref<512x256xf32, #tpu.memory_space<vmem>>, vector<256x256xf32>
    %cst_5 = arith.constant dense<0.000000e+00> : vector<2x256xf32>
    %16 = tpu.matmul %10, %15, %cst_5 {dimension_numbers = #tpu.dot_dimension_numbers<[1], [0], [0], [1], [0, 0, 1, 1], [], []>, precision = #tpu.contract_precision<fp32>} : vector<2x256xf32>, vector<256x256xf32>, vector<2x256xf32> -> vector<2x256xf32>
    %17 = arith.addf %14, %16 : vector<2x256xf32>
    %18 = arith.negf %17 : vector<2x256xf32>
    %19 = math.exp %18 : vector<2x256xf32>
    %cst_6 = arith.constant 1.000000e+00 : f32
    %20 = vector.broadcast %cst_6 : f32 to vector<2x256xf32>
    %21 = arith.addf %20, %19 : vector<2x256xf32>
    %22 = arith.divf %20, %21 : vector<2x256xf32>
    %23 = vector.extract_strided_slice %0 {offsets = [0, 0], sizes = [2, 256], strides = [1, 1]} : vector<2x1024xf32> to vector<2x256xf32>
    %24 = arith.mulf %23, %22 : vector<2x256xf32>
    %c0_7 = arith.constant 0 : index
    %c0_8 = arith.constant 0 : index
    %25 = vector.load %arg3[%c0_7, %c0_8] : memref<2x1024xf32, #tpu.memory_space<vmem>>, vector<2x256xf32>
    tpu.vector_store %arg3[%c0_7, %c0_8], %24 {strides = array<i32>} : memref<2x1024xf32, #tpu.memory_space<vmem>>, vector<2x256xf32>,
    %26 = vector.extract_strided_slice %0 {offsets = [0, 256], sizes = [2, 256], strides = [1, 1]} : vector<2x1024xf32> to vector<2x256xf32>
    %27 = arith.mulf %26, %22 : vector<2x256xf32>
    %c0_9 = arith.constant 0 : index
    %c256_10 = arith.constant 256 : index
    %28 = vector.load %arg3[%c0_9, %c256_10] : memref<2x1024xf32, #tpu.memory_space<vmem>>, vector<2x256xf32>
    tpu.vector_store %arg3[%c0_9, %c256_10], %27 {strides = array<i32>} : memref<2x1024xf32, #tpu.memory_space<vmem>>, vector<2x256xf32>,
    %29 = vector.extract_strided_slice %0 {offsets = [0, 512], sizes = [2, 256], strides = [1, 1]} : vector<2x1024xf32> to vector<2x256xf32>
    %30 = arith.mulf %29, %22 : vector<2x256xf32>
    %c0_11 = arith.constant 0 : index
    %c512 = arith.constant 512 : index
    %31 = vector.load %arg3[%c0_11, %c512] : memref<2x1024xf32, #tpu.memory_space<vmem>>, vector<2x256xf32>
    tpu.vector_store %arg3[%c0_11, %c512], %30 {strides = array<i32>} : memref<2x1024xf32, #tpu.memory_space<vmem>>, vector<2x256xf32>,
    %32 = vector.extract_strided_slice %0 {offsets = [0, 768], sizes = [2, 256], strides = [1, 1]} : vector<2x1024xf32> to vector<2x256xf32>
    %33 = arith.mulf %32, %22 : vector<2x256xf32>
    %c0_12 = arith.constant 0 : index
    %c768 = arith.constant 768 : index
    %34 = vector.load %arg3[%c0_12, %c768] : memref<2x1024xf32, #tpu.memory_space<vmem>>, vector<2x256xf32>
    tpu.vector_store %arg3[%c0_12, %c768], %33 {strides = array<i32>} : memref<2x1024xf32, #tpu.memory_space<vmem>>, vector<2x256xf32>,
    return
  }
  func.func @transform_0(%arg0: i32) -> (i32, i32) {
    %c0_i32 = arith.constant 0 : i32
    %c0_i32_0 = arith.constant 0 : i32
    return %arg0, %c0_i32 : i32, i32
  }
  func.func @transform_1(%arg0: i32) -> (i32, i32) {
    %c0_i32 = arith.constant 0 : i32
    %c0_i32_0 = arith.constant 0 : i32
    %c0_i32_1 = arith.constant 0 : i32
    return %c0_i32, %c0_i32_0 : i32, i32
  }
  func.func @transform_2(%arg0: i32) -> (i32, i32) {
    %c0_i32 = arith.constant 0 : i32
    %c0_i32_0 = arith.constant 0 : i32
    return %arg0, %c0_i32 : i32, i32
  }
}

</mosaic_0001>

<llo_original>
// kernel: tpu_custom_call.1
$region0: #{tpu_custom_call.1}
  #allocation0 [shape = 'u32[]', space=smem, size = 0x4, offset = 0x4, fixed_abs, tag = 'smem constant byte address 0x4 - core index']
  #allocation1 [shape = 'u32[144,128]{1,0:T(1,128)}', space=vmem, size = 0x12000, scoped, tag = 'internal scratch']
  %s0 = inlined_call_operand.hbm [shape: f32[2,1024], index: 0, kind: input, shape index: {}]
  %s1 = inlined_call_operand.hbm [shape: f32[512,256], index: 1, kind: input, shape index: {}]
  %s2 = inlined_call_operand.hbm [shape: f32[2,1024], index: 2, kind: output, shape index: {}]
  %s3 = sld [smem:[#allocation0]]
  $region26: #{tpu_custom_call.1} parent=0
    _
  %s5 = ssub.s32 1, %s3
  %s6 = scalar_select 0, %s5, %s3
  $region1: #{tpu_custom_call.1} parent=0
    #allocation2 [shape = 'u8[8192]{0}', space=vmem, size = 0x2000, scoped, tag = 'input window, operand 0, single buffered']
    #allocation3 [shape = 's32[1]{0}', space=sflag, size = 0x4, scoped, tag = 'scoped memory for tpu_custom_call.1']
    #allocation4 [shape = 's32[1]{0}', space=sflag, size = 0x4, scoped, tag = 'scoped memory for tpu_custom_call.1']
    #allocation5 [shape = 'u8[524288]{0}', space=vmem, size = 0x80000, scoped, tag = 'input window, operand 1, single buffered']
    #allocation6 [shape = 's32[1]{0}', space=sflag, size = 0x4, scoped, tag = 'scoped memory for tpu_custom_call.1']
    #allocation7 [shape = 'u8[8192]{0}', space=vmem, size = 0x2000, scoped, tag = 'output window, operand 0, single buffered']
    %7 = vsyncpa [#allocation3], 0
    %8 = vsyncpa [#allocation6], 0
    %9 = vsyncpa [#allocation4], 0
    // Predicated region
    $region2: #{tpu_custom_call.1} parent=1 // pred_check
      _
    $region3: #{tpu_custom_call.1} parent=1 // pred_check_branch
      %11 = sbr.rel (0) target = $region5
    $region4: #{tpu_custom_call.1} parent=1 // pred_region
      %s13 = ssub.s32 256, 256
      %14 = vsyncadd [#allocation3], %s13
      %s16 = sshll.u32 [#allocation2], 4
      %s17 = int_to_ptr.vmem [resolvable:$true] %s16
      %19 = dma.hbm_to_vmem [thread:$0]  %s0, 256, %s17, [#allocation3]
    $region5: #{tpu_custom_call.1} parent=1 // pred_fallthru
      _
    // Predicated region
    $region6: #{tpu_custom_call.1} parent=1 // pred_check
      _
    $region7: #{tpu_custom_call.1} parent=1 // pred_check_branch
      %21 = sbr.rel (0) target = $region9
    $region8: #{tpu_custom_call.1} parent=1 // pred_region
      %s23 = ssub.s32 16384, 16384
      %24 = vsyncadd [#allocation6], %s23
      %s25 = sshll.u32 [#allocation5], 4
      %s26 = int_to_ptr.vmem [resolvable:$true] %s25
      %31 = dma.hbm_to_vmem [thread:$0]  %s1, 16384, %s26, [#allocation6], 256, 256, 16
    $region9: #{tpu_custom_call.1} parent=1 // pred_fallthru
      _
    // Predicated region
    $region10: #{tpu_custom_call.1} parent=1 // pred_check
      _
    $region11: #{tpu_custom_call.1} parent=1 // pred_check_branch
      %33 = sbr.rel (0) target = $region13
    $region12: #{tpu_custom_call.1} parent=1 // pred_region
      %34 = dma.done [#allocation3], 256
    $region13: #{tpu_custom_call.1} parent=1 // pred_fallthru
      _
    // Predicated region
    $region14: #{tpu_custom_call.1} parent=1 // pred_check
      _
    $region15: #{tpu_custom_call.1} parent=1 // pred_check_branch
      %36 = sbr.rel (0) target = $region17
    $region16: #{tpu_custom_call.1} parent=1 // pred_region
      %37 = dma.done [#allocation6], 16384
    $region17: #{tpu_custom_call.1} parent=1 // pred_fallthru
      _
    %v38 = vld [vmem:[#allocation2] sm:$0xff]
    %v39 = vld [vmem:[#allocation2 + $0x8] sm:$0xff]
    %v41 = vrot.slane %v38, 4
    %v43 = vadd.f32 %v38, %v41
    %v44 = vmax.f32 %v38, %v41
    %v45 = vadd.f32 %v43, %v39
    %v46 = vmax.f32 %v44, %v39
    %v48 = vrot.slane %v39, 4
    %v50 = vadd.f32 %v45, %v48
    %v51 = vmax.f32 %v46, %v48
    %v52 = vmul.f32 %v50, 0.25
    %v53 = vld [vmem:[#allocation5] sm:$0xff]
    %v54 = vld [vmem:[#allocation5 + $0x8] sm:$0xff]
    %v55 = vld [vmem:[#allocation5 + $0x10] sm:$0xff]
    %v56 = vld [vmem:[#allocation5 + $0x18] sm:$0xff]
    %v57 = vld [vmem:[#allocation5 + $0x20] sm:$0xff]
    %v58 = vld [vmem:[#allocation5 + $0x28] sm:$0xff]
    %v59 = vld [vmem:[#allocation5 + $0x30] sm:$0xff]
    %v60 = vld [vmem:[#allocation5 + $0x38] sm:$0xff]
    %v61 = vld [vmem:[#allocation5 + $0x40] sm:$0xff]
    %v62 = vld [vmem:[#allocation5 + $0x48] sm:$0xff]
    %v63 = vld [vmem:[#allocation5 + $0x50] sm:$0xff]
    %v64 = vld [vmem:[#allocation5 + $0x58] sm:$0xff]
    %v65 = vld [vmem:[#allocation5 + $0x60] sm:$0xff]
    %v66 = vld [vmem:[#allocation5 + $0x68] sm:$0xff]
    %v67 = vld [vmem:[#allocation5 + $0x70] sm:$0xff]
    %v68 = vld [vmem:[#allocation5 + $0x78] sm:$0xff]
    %v69 = vld [vmem:[#allocation5 + $0x80] sm:$0xff]
    %v70 = vld [vmem:[#allocation5 + $0x88] sm:$0xff]
    %v71 = vld [vmem:[#allocation5 + $0x90] sm:$0xff]
    %v72 = vld [vmem:[#allocation5 + $0x98] sm:$0xff]
    %v73 = vld [vmem:[#allocation5 + $0xa0] sm:$0xff]
    %v74 = vld [vmem:[#allocation5 + $0xa8] sm:$0xff]
    %v75 = vld [vmem:[#allocation5 + $0xb0] sm:$0xff]
    %v76 = vld [vmem:[#allocation5 + $0xb8] sm:$0xff]
    %v77 = vld [vmem:[#allocation5 + $0xc0] sm:$0xff]
    %v78 = vld [vmem:[#allocation5 + $0xc8] sm:$0xff]
    %v79 = vld [vmem:[#allocation5 + $0xd0] sm:$0xff]
    %v80 = vld [vmem:[#allocation5 + $0xd8] sm:$0xff]
    %v81 = vld [vmem:[#allocation5 + $0xe0] sm:$0xff]
    %v82 = vld [vmem:[#allocation5 + $0xe8] sm:$0xff]
    %v83 = vld [vmem:[#allocation5 + $0xf0] sm:$0xff]
    %v84 = vld [vmem:[#allocation5 + $0xf8] sm:$0xff]
    %v85 = vld [vmem:[#allocation5 + $0x100] sm:$0xff]
    %v86 = vld [vmem:[#allocation5 + $0x108] sm:$0xff]
    %v87 = vld [vmem:[#allocation5 + $0x110] sm:$0xff]
    %v88 = vld [vmem:[#allocation5 + $0x118] sm:$0xff]
    %v89 = vld [vmem:[#allocation5 + $0x120] sm:$0xff]
    %v90 = vld [vmem:[#allocation5 + $0x128] sm:$0xff]
    %v91 = vld [vmem:[#allocation5 + $0x130] sm:$0xff]
    %v92 = vld [vmem:[#allocation5 + $0x138] sm:$0xff]
    %v93 = vld [vmem:[#allocation5 + $0x140] sm:$0xff]
    %v94 = vld [vmem:[#allocation5 + $0x148] sm:$0xff]
    %v95 = vld [vmem:[#allocation5 + $0x150] sm:$0xff]
    %v96 = vld [vmem:[#allocation5 + $0x158] sm:$0xff]
    %v97 = vld [vmem:[#allocation5 + $0x160] sm:$0xff]
    %v98 = vld [vmem:[#allocation5 + $0x168] sm:$0xff]
    %v99 = vld [vmem:[#allocation5 + $0x170] sm:$0xff]
    %v100 = vld [vmem:[#allocation5 + $0x178] sm:$0xff]
    %v101 = vld [vmem:[#allocation5 + $0x180] sm:$0xff]
    %v102 = vld [vmem:[#allocation5 + $0x188] sm:$0xff]
    %v103 = vld [vmem:[#allocation5 + $0x190] sm:$0xff]
    %v104 = vld [vmem:[#allocation5 + $0x198] sm:$0xff]
    %v105 = vld [vmem:[#allocation5 + $0x1a0] sm:$0xff]
    %v106 = vld [vmem:[#allocation5 + $0x1a8] sm:$0xff]
    %v107 = vld [vmem:[#allocation5 + $0x1b0] sm:$0xff]
    %v108 = vld [vmem:[#allocation5 + $0x1b8] sm:$0xff]
    %v109 = vld [vmem:[#allocation5 + $0x1c0] sm:$0xff]
    %v110 = vld [vmem:[#allocation5 + $0x1c8] sm:$0xff]
    %v111 = vld [vmem:[#allocation5 + $0x1d0] sm:$0xff]
    %v112 = vld [vmem:[#allocation5 + $0x1d8] sm:$0xff]
    %v113 = vld [vmem:[#allocation5 + $0x1e0] sm:$0xff]
    %v114 = vld [vmem:[#allocation5 + $0x1e8] sm:$0xff]
    %v115 = vld [vmem:[#allocation5 + $0x1f0] sm:$0xff]
    %v116 = vld [vmem:[#allocation5 + $0x1f8] sm:$0xff]
    %v117 = vld [vmem:[#allocation5 + $0x200] sm:$0xff]
    %v118 = vld [vmem:[#allocation5 + $0x208] sm:$0xff]
    %v119 = vld [vmem:[#allocation5 + $0x210] sm:$0xff]
    %v120 = vld [vmem:[#allocation5 + $0x218] sm:$0xff]
    %v121 = vld [vmem:[#allocation5 + $0x220] sm:$0xff]
    %v122 = vld [vmem:[#allocation5 + $0x228] sm:$0xff]
    %v123 = vld [vmem:[#allocation5 + $0x230] sm:$0xff]
    %v124 = vld [vmem:[#allocation5 + $0x238] sm:$0xff]
    %v125 = vld [vmem:[#allocation5 + $0x240] sm:$0xff]
    %v126 = vld [vmem:[#allocation5 + $0x248] sm:$0xff]
    %v127 = vld [vmem:[#allocation5 + $0x250] sm:$0xff]
    %v128 = vld [vmem:[#allocation5 + $0x258] sm:$0xff]
    %v129 = vld [vmem:[#allocation5 + $0x260] sm:$0xff]
    %v130 = vld [vmem:[#allocation5 + $0x268] sm:$0xff]
    %v131 = vld [vmem:[#allocation5 + $0x270] sm:$0xff]
    %v132 = vld [vmem:[#allocation5 + $0x278] sm:$0xff]
    %v133 = vld [vmem:[#allocation5 + $0x280] sm:$0xff]
    %v134 = vld [vmem:[#allocation5 + $0x288] sm:$0xff]
    %v135 = vld [vmem:[#allocation5 + $0x290] sm:$0xff]
    %v136 = vld [vmem:[#allocation5 + $0x298] sm:$0xff]
    %v137 = vld [vmem:[#allocation5 + $0x2a0] sm:$0xff]
    %v138 = vld [vmem:[#allocation5 + $0x2a8] sm:$0xff]
    %v139 = vld [vmem:[#allocation5 + $0x2b0] sm:$0xff]
    %v140 = vld [vmem:[#allocation5 + $0x2b8] sm:$0xff]
    %v141 = vld [vmem:[#allocation5 + $0x2c0] sm:$0xff]
    %v142 = vld [vmem:[#allocation5 + $0x2c8] sm:$0xff]
    %v143 = vld [vmem:[#allocation5 + $0x2d0] sm:$0xff]
    %v144 = vld [vmem:[#allocation5 + $0x2d8] sm:$0xff]
    %v145 = vld [vmem:[#allocation5 + $0x2e0] sm:$0xff]
    %v146 = vld [vmem:[#allocation5 + $0x2e8] sm:$0xff]
    %v147 = vld [vmem:[#allocation5 + $0x2f0] sm:$0xff]
    %v148 = vld [vmem:[#allocation5 + $0x2f8] sm:$0xff]
    %v149 = vld [vmem:[#allocation5 + $0x300] sm:$0xff]
    %v150 = vld [vmem:[#allocation5 + $0x308] sm:$0xff]
    %v151 = vld [vmem:[#allocation5 + $0x310] sm:$0xff]
    %v152 = vld [vmem:[#allocation5 + $0x318] sm:$0xff]
    %v153 = vld [vmem:[#allocation5 + $0x320] sm:$0xff]
    %v154 = vld [vmem:[#allocation5 + $0x328] sm:$0xff]
    %v155 = vld [vmem:[#allocation5 + $0x330] sm:$0xff]
    %v156 = vld [vmem:[#allocation5 + $0x338] sm:$0xff]
    %v157 = vld [vmem:[#allocation5 + $0x340] sm:$0xff]
    %v158 = vld [vmem:[#allocation5 + $0x348] sm:$0xff]
    %v159 = vld [vmem:[#allocation5 + $0x350] sm:$0xff]
    %v160 = vld [vmem:[#allocation5 + $0x358] sm:$0xff]
    %v161 = vld [vmem:[#allocation5 + $0x360] sm:$0xff]
    %v162 = vld [vmem:[#allocation5 + $0x368] sm:$0xff]
    %v163 = vld [vmem:[#allocation5 + $0x370] sm:$0xff]
    %v164 = vld [vmem:[#allocation5 + $0x378] sm:$0xff]
    %v165 = vld [vmem:[#allocation5 + $0x380] sm:$0xff]
    %v166 = vld [vmem:[#allocation5 + $0x388] sm:$0xff]
    %v167 = vld [vmem:[#allocation5 + $0x390] sm:$0xff]
    %v168 = vld [vmem:[#allocation5 + $0x398] sm:$0xff]
    %v169 = vld [vmem:[#allocation5 + $0x3a0] sm:$0xff]
    %v170 = vld [vmem:[#allocation5 + $0x3a8] sm:$0xff]
    %v171 = vld [vmem:[#allocation5 + $0x3b0] sm:$0xff]
    %v172 = vld [vmem:[#allocation5 + $0x3b8] sm:$0xff]
    %v173 = vld [vmem:[#allocation5 + $0x3c0] sm:$0xff]
    %v174 = vld [vmem:[#allocation5 + $0x3c8] sm:$0xff]
    %v175 = vld [vmem:[#allocation5 + $0x3d0] sm:$0xff]
    %v176 = vld [vmem:[#allocation5 + $0x3d8] sm:$0xff]
    %v177 = vld [vmem:[#allocation5 + $0x3e0] sm:$0xff]
    %v178 = vld [vmem:[#allocation5 + $0x3e8] sm:$0xff]
    %v179 = vld [vmem:[#allocation5 + $0x3f0] sm:$0xff]
    %v180 = vld [vmem:[#allocation5 + $0x3f8] sm:$0xff]
    %v183 = vunpack.c.l.s4 1983009808
    %v184 = vunpack.c.0.s8 %v183
    %v185 = vlaneseq
    %v186 = vshrl.u32 %v185, 7
    %v187 = vsub.s32 %v184, %v186
    %v188 = vrot.slane %v51, %v187
    %v189 = vcombine.high %v188, %v188
    %v192 = vand.u32 %v118, 4294901760
    %193 = vmatprep.subr.mxu0 %v192
    %v194 = vand.u32 %v117, 4294901760
    %195 = vmatpush1.msra.mxu0 %v194
    %v196 = vand.u32 %v120, 4294901760
    %197 = vmatprep.subr.mxu0 %v196
    %v198 = vand.u32 %v119, 4294901760
    %199 = vmatpush1.msra.mxu0 %v198
    %v200 = vand.u32 %v122, 4294901760
    %201 = vmatprep.subr.mxu0 %v200
    %v202 = vand.u32 %v121, 4294901760
    %203 = vmatpush1.msra.mxu0 %v202
    %v204 = vand.u32 %v124, 4294901760
    %205 = vmatprep.subr.mxu0 %v204
    %v206 = vand.u32 %v123, 4294901760
    %207 = vmatpush1.msra.mxu0 %v206
    %v208 = vand.u32 %v126, 4294901760
    %209 = vmatprep.subr.mxu0 %v208
    %v210 = vand.u32 %v125, 4294901760
    %211 = vmatpush1.msra.mxu0 %v210
    %v212 = vand.u32 %v128, 4294901760
    %213 = vmatprep.subr.mxu0 %v212
    %v214 = vand.u32 %v127, 4294901760
    %215 = vmatpush1.msra.mxu0 %v214
    %v216 = vand.u32 %v130, 4294901760
    %217 = vmatprep.subr.mxu0 %v216
    %v218 = vand.u32 %v129, 4294901760
    %219 = vmatpush1.msra.mxu0 %v218
    %v220 = vand.u32 %v132, 4294901760
    %221 = vmatprep.subr.mxu0 %v220
    %v222 = vand.u32 %v131, 4294901760
    %223 = vmatpush1.msra.mxu0 %v222
    %v224 = vand.u32 %v134, 4294901760
    %225 = vmatprep.subr.mxu0 %v224
    %v226 = vand.u32 %v133, 4294901760
    %227 = vmatpush1.msra.mxu0 %v226
    %v228 = vand.u32 %v136, 4294901760
    %229 = vmatprep.subr.mxu0 %v228
    %v230 = vand.u32 %v135, 4294901760
    %231 = vmatpush1.msra.mxu0 %v230
    %v232 = vand.u32 %v138, 4294901760
    %233 = vmatprep.subr.mxu0 %v232
    %v234 = vand.u32 %v137, 4294901760
    %235 = vmatpush1.msra.mxu0 %v234
    %v236 = vand.u32 %v140, 4294901760
    %237 = vmatprep.subr.mxu0 %v236
    %v238 = vand.u32 %v139, 4294901760
    %239 = vmatpush1.msra.mxu0 %v238
    %v240 = vand.u32 %v142, 4294901760
    %241 = vmatprep.subr.mxu0 %v240
    %v242 = vand.u32 %v141, 4294901760
    %243 = vmatpush1.msra.mxu0 %v242
    %v244 = vand.u32 %v144, 4294901760
    %245 = vmatprep.subr.mxu0 %v244
    %v246 = vand.u32 %v143, 4294901760
    %247 = vmatpush1.msra.mxu0 %v246
    %v248 = vand.u32 %v146, 4294901760
    %249 = vmatprep.subr.mxu0 %v248
    %v250 = vand.u32 %v145, 4294901760
    %251 = vmatpush1.msra.mxu0 %v250
    %v252 = vand.u32 %v148, 4294901760
    %253 = vmatprep.subr.mxu0 %v252
    %v254 = vand.u32 %v147, 4294901760
    %255 = vmatpush1.msra.mxu0 %v254
    %v256 = vand.u32 %v150, 4294901760
    %257 = vmatprep.subr.mxu0 %v256
    %v258 = vand.u32 %v149, 4294901760
    %259 = vmatpush1.msra.mxu0 %v258
    %v260 = vand.u32 %v152, 4294901760
    %261 = vmatprep.subr.mxu0 %v260
    %v262 = vand.u32 %v151, 4294901760
    %263 = vmatpush1.msra.mxu0 %v262
    %v264 = vand.u32 %v154, 4294901760
    %265 = vmatprep.subr.mxu0 %v264
    %v266 = vand.u32 %v153, 4294901760
    %267 = vmatpush1.msra.mxu0 %v266
    %v268 = vand.u32 %v156, 4294901760
    %269 = vmatprep.subr.mxu0 %v268
    %v270 = vand.u32 %v155, 4294901760
    %271 = vmatpush1.msra.mxu0 %v270
    %v272 = vand.u32 %v158, 4294901760
    %273 = vmatprep.subr.mxu0 %v272
    %v274 = vand.u32 %v157, 4294901760
    %275 = vmatpush1.msra.mxu0 %v274
    %v276 = vand.u32 %v160, 4294901760
    %277 = vmatprep.subr.mxu0 %v276
    %v278 = vand.u32 %v159, 4294901760
    %279 = vmatpush1.msra.mxu0 %v278
    %v280 = vand.u32 %v162, 4294901760
    %281 = vmatprep.subr.mxu0 %v280
    %v282 = vand.u32 %v161, 4294901760
    %283 = vmatpush1.msra.mxu0 %v282
    %v284 = vand.u32 %v164, 4294901760
    %285 = vmatprep.subr.mxu0 %v284
    %v286 = vand.u32 %v163, 4294901760
    %287 = vmatpush1.msra.mxu0 %v286
    %v288 = vand.u32 %v166, 4294901760
    %289 = vmatprep.subr.mxu0 %v288
    %v290 = vand.u32 %v165, 4294901760
    %291 = vmatpush1.msra.mxu0 %v290
    %v292 = vand.u32 %v168, 4294901760
    %293 = vmatprep.subr.mxu0 %v292
    %v294 = vand.u32 %v167, 4294901760
    %295 = vmatpush1.msra.mxu0 %v294
    %v296 = vand.u32 %v170, 4294901760
    %297 = vmatprep.subr.mxu0 %v296
    %v298 = vand.u32 %v169, 4294901760
    %299 = vmatpush1.msra.mxu0 %v298
    %v300 = vand.u32 %v172, 4294901760
    %301 = vmatprep.subr.mxu0 %v300
    %v302 = vand.u32 %v171, 4294901760
    %303 = vmatpush1.msra.mxu0 %v302
    %v304 = vand.u32 %v174, 4294901760
    %305 = vmatprep.subr.mxu0 %v304
    %v306 = vand.u32 %v173, 4294901760
    %307 = vmatpush1.msra.mxu0 %v306
    %v308 = vand.u32 %v176, 4294901760
    %309 = vmatprep.subr.mxu0 %v308
    %v310 = vand.u32 %v175, 4294901760
    %311 = vmatpush1.msra.mxu0 %v310
    %v312 = vand.u32 %v178, 4294901760
    %313 = vmatprep.subr.mxu0 %v312
    %v314 = vand.u32 %v177, 4294901760
    %315 = vmatpush1.msra.mxu0 %v314
    %v316 = vand.u32 %v180, 4294901760
    %317 = vmatprep.subr.mxu0 %v316
    %v318 = vand.u32 %v179, 4294901760
    %319 = vmatpush1.msra.mxu0 %v318
    %v320 = vand.u32 %v189, 4294901760
    %v321 = vsub.f32 %v189, %v320
    %v322 = vand.u32 %v321, 4294901760
    %v323 = vsub.f32 %v321, %v322
    %v324 = vand.u32 %v323, 4294901760
    %325 = vmatprep.mubr.f32.mxu0 %v324
    %v326 = vand.u32 %v188, 4294901760
    %v327 = vsub.f32 %v188, %v326
    %v328 = vand.u32 %v327, 4294901760
    %v329 = vsub.f32 %v327, %v328
    %v330 = vand.u32 %v329, 4294901760
    %331 = vmatmul.mubr.f32.gmra.mrb[0].mxu0 %v330
    %v332 = vpop.f32.mrb[0].mxu0
    %v333 = vadd.f32 0.0, %v332
    %v334 = vpop.f32.mrb[0].mxu0
    %v335 = vadd.f32 0.0, %v334
    %336 = vdwg.mxu0
    %v337 = vand.u32 %v118, 4294901760
    %v338 = vsub.f32 %v118, %v337
    %v339 = vand.u32 %v338, 4294901760
    %v340 = vsub.f32 %v338, %v339
    %v341 = vand.u32 %v340, 4294901760
    %342 = vmatprep.subr.mxu0 %v341
    %v343 = vand.u32 %v117, 4294901760
    %v344 = vsub.f32 %v117, %v343
    %v345 = vand.u32 %v344, 4294901760
    %v346 = vsub.f32 %v344, %v345
    %v347 = vand.u32 %v346, 4294901760
    %348 = vmatpush1.msra.mxu0 %v347
    %v349 = vand.u32 %v120, 4294901760
    %v350 = vsub.f32 %v120, %v349
    %v351 = vand.u32 %v350, 4294901760
    %v352 = vsub.f32 %v350, %v351
    %v353 = vand.u32 %v352, 4294901760
    %354 = vmatprep.subr.mxu0 %v353
    %v355 = vand.u32 %v119, 4294901760
    %v356 = vsub.f32 %v119, %v355
    %v357 = vand.u32 %v356, 4294901760
    %v358 = vsub.f32 %v356, %v357
    %v359 = vand.u32 %v358, 4294901760
    %360 = vmatpush1.msra.mxu0 %v359
    %v361 = vand.u32 %v122, 4294901760
    %v362 = vsub.f32 %v122, %v361
    %v363 = vand.u32 %v362, 4294901760
    %v364 = vsub.f32 %v362, %v363
    %v365 = vand.u32 %v364, 4294901760
    %366 = vmatprep.subr.mxu0 %v365
    %v367 = vand.u32 %v121, 4294901760
    %v368 = vsub.f32 %v121, %v367
    %v369 = vand.u32 %v368, 4294901760
    %v370 = vsub.f32 %v368, %v369
    %v371 = vand.u32 %v370, 4294901760
    %372 = vmatpush1.msra.mxu0 %v371
    %v373 = vand.u32 %v124, 4294901760
    %v374 = vsub.f32 %v124, %v373
    %v375 = vand.u32 %v374, 4294901760
    %v376 = vsub.f32 %v374, %v375
    %v377 = vand.u32 %v376, 4294901760
    %378 = vmatprep.subr.mxu0 %v377
    %v379 = vand.u32 %v123, 4294901760
    %v380 = vsub.f32 %v123, %v379
    %v381 = vand.u32 %v380, 4294901760
    %v382 = vsub.f32 %v380, %v381
    %v383 = vand.u32 %v382, 4294901760
    %384 = vmatpush1.msra.mxu0 %v383
    %v385 = vand.u32 %v126, 4294901760
    %v386 = vsub.f32 %v126, %v385
    %v387 = vand.u32 %v386, 4294901760
    %v388 = vsub.f32 %v386, %v387
    %v389 = vand.u32 %v388, 4294901760
    %390 = vmatprep.subr.mxu0 %v389
    %v391 = vand.u32 %v125, 4294901760
    %v392 = vsub.f32 %v125, %v391
    %v393 = vand.u32 %v392, 4294901760
    %v394 = vsub.f32 %v392, %v393
    %v395 = vand.u32 %v394, 4294901760
    %396 = vmatpush1.msra.mxu0 %v395
    %v397 = vand.u32 %v128, 4294901760
    %v398 = vsub.f32 %v128, %v397
    %v399 = vand.u32 %v398, 4294901760
    %v400 = vsub.f32 %v398, %v399
    %v401 = vand.u32 %v400, 4294901760
    %402 = vmatprep.subr.mxu0 %v401
    %v403 = vand.u32 %v127, 4294901760
    %v404 = vsub.f32 %v127, %v403
    %v405 = vand.u32 %v404, 4294901760
    %v406 = vsub.f32 %v404, %v405
    %v407 = vand.u32 %v406, 4294901760
    %408 = vmatpush1.msra.mxu0 %v407
    %v409 = vand.u32 %v130, 4294901760
    %v410 = vsub.f32 %v130, %v409
    %v411 = vand.u32 %v410, 4294901760
    %v412 = vsub.f32 %v410, %v411
    %v413 = vand.u32 %v412, 4294901760
    %414 = vmatprep.subr.mxu0 %v413
    %v415 = vand.u32 %v129, 4294901760
    %v416 = vsub.f32 %v129, %v415
    %v417 = vand.u32 %v416, 4294901760
    %v418 = vsub.f32 %v416, %v417
    %v419 = vand.u32 %v418, 4294901760
    %420 = vmatpush1.msra.mxu0 %v419
    %v421 = vand.u32 %v132, 4294901760
    %v422 = vsub.f32 %v132, %v421
    %v423 = vand.u32 %v422, 4294901760
    %v424 = vsub.f32 %v422, %v423
    %v425 = vand.u32 %v424, 4294901760
    %426 = vmatprep.subr.mxu0 %v425
    %v427 = vand.u32 %v131, 4294901760
    %v428 = vsub.f32 %v131, %v427
    %v429 = vand.u32 %v428, 4294901760
    %v430 = vsub.f32 %v428, %v429
    %v431 = vand.u32 %v430, 4294901760
    %432 = vmatpush1.msra.mxu0 %v431
    %v433 = vand.u32 %v134, 4294901760
    %v434 = vsub.f32 %v134, %v433
    %v435 = vand.u32 %v434, 4294901760
    %v436 = vsub.f32 %v434, %v435
    %v437 = vand.u32 %v436, 4294901760
    %438 = vmatprep.subr.mxu0 %v437
    %v439 = vand.u32 %v133, 4294901760
    %v440 = vsub.f32 %v133, %v439
    %v441 = vand.u32 %v440, 4294901760
    %v442 = vsub.f32 %v440, %v441
    %v443 = vand.u32 %v442, 4294901760
    %444 = vmatpush1.msra.mxu0 %v443
    %v445 = vand.u32 %v136, 4294901760
    %v446 = vsub.f32 %v136, %v445
    %v447 = vand.u32 %v446, 4294901760
    %v448 = vsub.f32 %v446, %v447
    %v449 = vand.u32 %v448, 4294901760
    %450 = vmatprep.subr.mxu0 %v449
    %v451 = vand.u32 %v135, 4294901760
    %v452 = vsub.f32 %v135, %v451
    %v453 = vand.u32 %v452, 4294901760
    %v454 = vsub.f32 %v452, %v453
    %v455 = vand.u32 %v454, 4294901760
    %456 = vmatpush1.msra.mxu0 %v455
    %v457 = vand.u32 %v138, 4294901760
    %v458 = vsub.f32 %v138, %v457
    %v459 = vand.u32 %v458, 4294901760
    %v460 = vsub.f32 %v458, %v459
    %v461 = vand.u32 %v460, 4294901760
    %462 = vmatprep.subr.mxu0 %v461
    %v463 = vand.u32 %v137, 4294901760
    %v464 = vsub.f32 %v137, %v463
    %v465 = vand.u32 %v464, 4294901760
    %v466 = vsub.f32 %v464, %v465
    %v467 = vand.u32 %v466, 4294901760
    %468 = vmatpush1.msra.mxu0 %v467
    %v469 = vand.u32 %v140, 4294901760
    %v470 = vsub.f32 %v140, %v469
    %v471 = vand.u32 %v470, 4294901760
    %v472 = vsub.f32 %v470, %v471
    %v473 = vand.u32 %v472, 4294901760
    %474 = vmatprep.subr.mxu0 %v473
    %v475 = vand.u32 %v139, 4294901760
    %v476 = vsub.f32 %v139, %v475
    %v477 = vand.u32 %v476, 4294901760
    %v478 = vsub.f32 %v476, %v477
    %v479 = vand.u32 %v478, 4294901760
    %480 = vmatpush1.msra.mxu0 %v479
    %v481 = vand.u32 %v142, 4294901760
    %v482 = vsub.f32 %v142, %v481
    %v483 = vand.u32 %v482, 4294901760
    %v484 = vsub.f32 %v482, %v483
    %v485 = vand.u32 %v484, 4294901760
    %486 = vmatprep.subr.mxu0 %v485
    %v487 = vand.u32 %v141, 4294901760
    %v488 = vsub.f32 %v141, %v487
    %v489 = vand.u32 %v488, 4294901760
    %v490 = vsub.f32 %v488, %v489
    %v491 = vand.u32 %v490, 4294901760
    %492 = vmatpush1.msra.mxu0 %v491
    %v493 = vand.u32 %v144, 4294901760
    %v494 = vsub.f32 %v144, %v493
    %v495 = vand.u32 %v494, 4294901760
    %v496 = vsub.f32 %v494, %v495
    %v497 = vand.u32 %v496, 4294901760
    %498 = vmatprep.subr.mxu0 %v497
    %v499 = vand.u32 %v143, 4294901760
    %v500 = vsub.f32 %v143, %v499
    %v501 = vand.u32 %v500, 4294901760
    %v502 = vsub.f32 %v500, %v501
    %v503 = vand.u32 %v502, 4294901760
    %504 = vmatpush1.msra.mxu0 %v503
    %v505 = vand.u32 %v146, 4294901760
    %v506 = vsub.f32 %v146, %v505
    %v507 = vand.u32 %v506, 4294901760
    %v508 = vsub.f32 %v506, %v507
    %v509 = vand.u32 %v508, 4294901760
    %510 = vmatprep.subr.mxu0 %v509
    %v511 = vand.u32 %v145, 4294901760
    %v512 = vsub.f32 %v145, %v511
    %v513 = vand.u32 %v512, 4294901760
    %v514 = vsub.f32 %v512, %v513
    %v515 = vand.u32 %v514, 4294901760
    %516 = vmatpush1.msra.mxu0 %v515
    %v517 = vand.u32 %v148, 4294901760
    %v518 = vsub.f32 %v148, %v517
    %v519 = vand.u32 %v518, 4294901760
    %v520 = vsub.f32 %v518, %v519
    %v521 = vand.u32 %v520, 4294901760
    %522 = vmatprep.subr.mxu0 %v521
    %v523 = vand.u32 %v147, 4294901760
    %v524 = vsub.f32 %v147, %v523
    %v525 = vand.u32 %v524, 4294901760
    %v526 = vsub.f32 %v524, %v525
    %v527 = vand.u32 %v526, 4294901760
    %528 = vmatpush1.msra.mxu0 %v527
    %v529 = vand.u32 %v150, 4294901760
    %v530 = vsub.f32 %v150, %v529
    %v531 = vand.u32 %v530, 4294901760
    %v532 = vsub.f32 %v530, %v531
    %v533 = vand.u32 %v532, 4294901760
    %534 = vmatprep.subr.mxu0 %v533
    %v535 = vand.u32 %v149, 4294901760
    %v536 = vsub.f32 %v149, %v535
    %v537 = vand.u32 %v536, 4294901760
    %v538 = vsub.f32 %v536, %v537
    %v539 = vand.u32 %v538, 4294901760
    %540 = vmatpush1.msra.mxu0 %v539
    %v541 = vand.u32 %v152, 4294901760
    %v542 = vsub.f32 %v152, %v541
    %v543 = vand.u32 %v542, 4294901760
    %v544 = vsub.f32 %v542, %v543
    %v545 = vand.u32 %v544, 4294901760
    %546 = vmatprep.subr.mxu0 %v545
    %v547 = vand.u32 %v151, 4294901760
    %v548 = vsub.f32 %v151, %v547
    %v549 = vand.u32 %v548, 4294901760
    %v550 = vsub.f32 %v548, %v549
    %v551 = vand.u32 %v550, 4294901760
    %552 = vmatpush1.msra.mxu0 %v551
    %v553 = vand.u32 %v154, 4294901760
    %v554 = vsub.f32 %v154, %v553
    %v555 = vand.u32 %v554, 4294901760
    %v556 = vsub.f32 %v554, %v555
    %v557 = vand.u32 %v556, 4294901760
    %558 = vmatprep.subr.mxu0 %v557
    %v559 = vand.u32 %v153, 4294901760
    %v560 = vsub.f32 %v153, %v559
    %v561 = vand.u32 %v560, 4294901760
    %v562 = vsub.f32 %v560, %v561
    %v563 = vand.u32 %v562, 4294901760
    %564 = vmatpush1.msra.mxu0 %v563
    %v565 = vand.u32 %v156, 4294901760
    %v566 = vsub.f32 %v156, %v565
    %v567 = vand.u32 %v566, 4294901760
    %v568 = vsub.f32 %v566, %v567
    %v569 = vand.u32 %v568, 4294901760
    %570 = vmatprep.subr.mxu0 %v569
    %v571 = vand.u32 %v155, 4294901760
    %v572 = vsub.f32 %v155, %v571
    %v573 = vand.u32 %v572, 4294901760
    %v574 = vsub.f32 %v572, %v573
    %v575 = vand.u32 %v574, 4294901760
    %576 = vmatpush1.msra.mxu0 %v575
    %v577 = vand.u32 %v158, 4294901760
    %v578 = vsub.f32 %v158, %v577
    %v579 = vand.u32 %v578, 4294901760
    %v580 = vsub.f32 %v578, %v579
    %v581 = vand.u32 %v580, 4294901760
    %582 = vmatprep.subr.mxu0 %v581
    %v583 = vand.u32 %v157, 4294901760
    %v584 = vsub.f32 %v157, %v583
    %v585 = vand.u32 %v584, 4294901760
    %v586 = vsub.f32 %v584, %v585
    %v587 = vand.u32 %v586, 4294901760
    %588 = vmatpush1.msra.mxu0 %v587
    %v589 = vand.u32 %v160, 4294901760
    %v590 = vsub.f32 %v160, %v589
    %v591 = vand.u32 %v590, 4294901760
    %v592 = vsub.f32 %v590, %v591
    %v593 = vand.u32 %v592, 4294901760
    %594 = vmatprep.subr.mxu0 %v593
    %v595 = vand.u32 %v159, 4294901760
    %v596 = vsub.f32 %v159, %v595
    %v597 = vand.u32 %v596, 4294901760
    %v598 = vsub.f32 %v596, %v597
    %v599 = vand.u32 %v598, 4294901760
    %600 = vmatpush1.msra.mxu0 %v599
    %v601 = vand.u32 %v162, 4294901760
    %v602 = vsub.f32 %v162, %v601
    %v603 = vand.u32 %v602, 4294901760
    %v604 = vsub.f32 %v602, %v603
    %v605 = vand.u32 %v604, 4294901760
    %606 = vmatprep.subr.mxu0 %v605
    %v607 = vand.u32 %v161, 4294901760
    %v608 = vsub.f32 %v161, %v607
    %v609 = vand.u32 %v608, 4294901760
    %v610 = vsub.f32 %v608, %v609
    %v611 = vand.u32 %v610, 4294901760
    %612 = vmatpush1.msra.mxu0 %v611
    %v613 = vand.u32 %v164, 4294901760
    %v614 = vsub.f32 %v164, %v613
    %v615 = vand.u32 %v614, 4294901760
    %v616 = vsub.f32 %v614, %v615
    %v617 = vand.u32 %v616, 4294901760
    %618 = vmatprep.subr.mxu0 %v617
    %v619 = vand.u32 %v163, 4294901760
    %v620 = vsub.f32 %v163, %v619
    %v621 = vand.u32 %v620, 4294901760
    %v622 = vsub.f32 %v620, %v621
    %v623 = vand.u32 %v622, 4294901760
    %624 = vmatpush1.msra.mxu0 %v623
    %v625 = vand.u32 %v166, 4294901760
    %v626 = vsub.f32 %v166, %v625
    %v627 = vand.u32 %v626, 4294901760
    %v628 = vsub.f32 %v626, %v627
    %v629 = vand.u32 %v628, 4294901760
    %630 = vmatprep.subr.mxu0 %v629
    %v631 = vand.u32 %v165, 4294901760
    %v632 = vsub.f32 %v165, %v631
    %v633 = vand.u32 %v632, 4294901760
    %v634 = vsub.f32 %v632, %v633
    %v635 = vand.u32 %v634, 4294901760
    %636 = vmatpush1.msra.mxu0 %v635
    %v637 = vand.u32 %v168, 4294901760
    %v638 = vsub.f32 %v168, %v637
    %v639 = vand.u32 %v638, 4294901760
    %v640 = vsub.f32 %v638, %v639
    %v641 = vand.u32 %v640, 4294901760
    %642 = vmatprep.subr.mxu0 %v641
    %v643 = vand.u32 %v167, 4294901760
    %v644 = vsub.f32 %v167, %v643
    %v645 = vand.u32 %v644, 4294901760
    %v646 = vsub.f32 %v644, %v645
    %v647 = vand.u32 %v646, 4294901760
    %648 = vmatpush1.msra.mxu0 %v647
    %v649 = vand.u32 %v170, 4294901760
    %v650 = vsub.f32 %v170, %v649
    %v651 = vand.u32 %v650, 4294901760
    %v652 = vsub.f32 %v650, %v651
    %v653 = vand.u32 %v652, 4294901760
    %654 = vmatprep.subr.mxu0 %v653
    %v655 = vand.u32 %v169, 4294901760
    %v656 = vsub.f32 %v169, %v655
    %v657 = vand.u32 %v656, 4294901760
    %v658 = vsub.f32 %v656, %v657
    %v659 = vand.u32 %v658, 4294901760
    %660 = vmatpush1.msra.mxu0 %v659
    %v661 = vand.u32 %v172, 4294901760
    %v662 = vsub.f32 %v172, %v661
    %v663 = vand.u32 %v662, 4294901760
    %v664 = vsub.f32 %v662, %v663
    %v665 = vand.u32 %v664, 4294901760
    %666 = vmatprep.subr.mxu0 %v665
    %v667 = vand.u32 %v171, 4294901760
    %v668 = vsub.f32 %v171, %v667
    %v669 = vand.u32 %v668, 4294901760
    %v670 = vsub.f32 %v668, %v669
    %v671 = vand.u32 %v670, 4294901760
    %672 = vmatpush1.msra.mxu0 %v671
    %v673 = vand.u32 %v174, 4294901760
    %v674 = vsub.f32 %v174, %v673
    %v675 = vand.u32 %v674, 4294901760
    %v676 = vsub.f32 %v674, %v675
    %v677 = vand.u32 %v676, 4294901760
    %678 = vmatprep.subr.mxu0 %v677
    %v679 = vand.u32 %v173, 4294901760
    %v680 = vsub.f32 %v173, %v679
    %v681 = vand.u32 %v680, 4294901760
    %v682 = vsub.f32 %v680, %v681
    %v683 = vand.u32 %v682, 4294901760
    %684 = vmatpush1.msra.mxu0 %v683
    %v685 = vand.u32 %v176, 4294901760
    %v686 = vsub.f32 %v176, %v685
    %v687 = vand.u32 %v686, 4294901760
    %v688 = vsub.f32 %v686, %v687
    %v689 = vand.u32 %v688, 4294901760
    %690 = vmatprep.subr.mxu0 %v689
    %v691 = vand.u32 %v175, 4294901760
    %v692 = vsub.f32 %v175, %v691
    %v693 = vand.u32 %v692, 4294901760
    %v694 = vsub.f32 %v692, %v693
    %v695 = vand.u32 %v694, 4294901760
    %696 = vmatpush1.msra.mxu0 %v695
    %v697 = vand.u32 %v178, 4294901760
    %v698 = vsub.f32 %v178, %v697
    %v699 = vand.u32 %v698, 4294901760
    %v700 = vsub.f32 %v698, %v699
    %v701 = vand.u32 %v700, 4294901760
    %702 = vmatprep.subr.mxu0 %v701
    %v703 = vand.u32 %v177, 4294901760
    %v704 = vsub.f32 %v177, %v703
    %v705 = vand.u32 %v704, 4294901760
    %v706 = vsub.f32 %v704, %v705
    %v707 = vand.u32 %v706, 4294901760
    %708 = vmatpush1.msra.mxu0 %v707
    %v709 = vand.u32 %v180, 4294901760
    %v710 = vsub.f32 %v180, %v709
    %v711 = vand.u32 %v710, 4294901760
    %v712 = vsub.f32 %v710, %v711
    %v713 = vand.u32 %v712, 4294901760
    %714 = vmatprep.subr.mxu0 %v713
    %v715 = vand.u32 %v179, 4294901760
    %v716 = vsub.f32 %v179, %v715
    %v717 = vand.u32 %v716, 4294901760
    %v718 = vsub.f32 %v716, %v717
    %v719 = vand.u32 %v718, 4294901760
    %720 = vmatpush1.msra.mxu0 %v719
    %v721 = vand.u32 %v189, 4294901760
    %722 = vmatprep.mubr.f32.mxu0 %v721
    %v723 = vand.u32 %v188, 4294901760
    %724 = vmatmul.mubr.f32.gmra.mrb[0].mxu0 %v723
    %v725 = vpop.f32.mrb[0].mxu0
    %v726 = vadd.f32 %v333, %v725
    %v727 = vpop.f32.mrb[0].mxu0
    %v728 = vadd.f32 %v335, %v727
    %729 = vdwg.mxu0
    %v730 = vand.u32 %v118, 4294901760
    %v731 = vsub.f32 %v118, %v730
    %732 = vmatprep.subr.mxu0 %v731
    %v733 = vand.u32 %v117, 4294901760
    %v734 = vsub.f32 %v117, %v733
    %735 = vmatpush1.msra.mxu0 %v734
    %v736 = vand.u32 %v120, 4294901760
    %v737 = vsub.f32 %v120, %v736
    %738 = vmatprep.subr.mxu0 %v737
    %v739 = vand.u32 %v119, 4294901760
    %v740 = vsub.f32 %v119, %v739
    %741 = vmatpush1.msra.mxu0 %v740
    %v742 = vand.u32 %v122, 4294901760
    %v743 = vsub.f32 %v122, %v742
    %744 = vmatprep.subr.mxu0 %v743
    %v745 = vand.u32 %v121, 4294901760
    %v746 = vsub.f32 %v121, %v745
    %747 = vmatpush1.msra.mxu0 %v746
    %v748 = vand.u32 %v124, 4294901760
    %v749 = vsub.f32 %v124, %v748
    %750 = vmatprep.subr.mxu0 %v749
    %v751 = vand.u32 %v123, 4294901760
    %v752 = vsub.f32 %v123, %v751
    %753 = vmatpush1.msra.mxu0 %v752
    %v754 = vand.u32 %v126, 4294901760
    %v755 = vsub.f32 %v126, %v754
    %756 = vmatprep.subr.mxu0 %v755
    %v757 = vand.u32 %v125, 4294901760
    %v758 = vsub.f32 %v125, %v757
    %759 = vmatpush1.msra.mxu0 %v758
    %v760 = vand.u32 %v128, 4294901760
    %v761 = vsub.f32 %v128, %v760
    %762 = vmatprep.subr.mxu0 %v761
    %v763 = vand.u32 %v127, 4294901760
    %v764 = vsub.f32 %v127, %v763
    %765 = vmatpush1.msra.mxu0 %v764
    %v766 = vand.u32 %v130, 4294901760
    %v767 = vsub.f32 %v130, %v766
    %768 = vmatprep.subr.mxu0 %v767
    %v769 = vand.u32 %v129, 4294901760
    %v770 = vsub.f32 %v129, %v769
    %771 = vmatpush1.msra.mxu0 %v770
    %v772 = vand.u32 %v132, 4294901760
    %v773 = vsub.f32 %v132, %v772
    %774 = vmatprep.subr.mxu0 %v773
    %v775 = vand.u32 %v131, 4294901760
    %v776 = vsub.f32 %v131, %v775
    %777 = vmatpush1.msra.mxu0 %v776
    %v778 = vand.u32 %v134, 4294901760
    %v779 = vsub.f32 %v134, %v778
    %780 = vmatprep.subr.mxu0 %v779
    %v781 = vand.u32 %v133, 4294901760
    %v782 = vsub.f32 %v133, %v781
    %783 = vmatpush1.msra.mxu0 %v782
    %v784 = vand.u32 %v136, 4294901760
    %v785 = vsub.f32 %v136, %v784
    %786 = vmatprep.subr.mxu0 %v785
    %v787 = vand.u32 %v135, 4294901760
    %v788 = vsub.f32 %v135, %v787
    %789 = vmatpush1.msra.mxu0 %v788
    %v790 = vand.u32 %v138, 4294901760
    %v791 = vsub.f32 %v138, %v790
    %792 = vmatprep.subr.mxu0 %v791
    %v793 = vand.u32 %v137, 4294901760
    %v794 = vsub.f32 %v137, %v793
    %795 = vmatpush1.msra.mxu0 %v794
    %v796 = vand.u32 %v140, 4294901760
    %v797 = vsub.f32 %v140, %v796
    %798 = vmatprep.subr.mxu0 %v797
    %v799 = vand.u32 %v139, 4294901760
    %v800 = vsub.f32 %v139, %v799
    %801 = vmatpush1.msra.mxu0 %v800
    %v802 = vand.u32 %v142, 4294901760
    %v803 = vsub.f32 %v142, %v802
    %804 = vmatprep.subr.mxu0 %v803
    %v805 = vand.u32 %v141, 4294901760
    %v806 = vsub.f32 %v141, %v805
    %807 = vmatpush1.msra.mxu0 %v806
    %v808 = vand.u32 %v144, 4294901760
    %v809 = vsub.f32 %v144, %v808
    %810 = vmatprep.subr.mxu0 %v809
    %v811 = vand.u32 %v143, 4294901760
    %v812 = vsub.f32 %v143, %v811
    %813 = vmatpush1.msra.mxu0 %v812
    %v814 = vand.u32 %v146, 4294901760
    %v815 = vsub.f32 %v146, %v814
    %816 = vmatprep.subr.mxu0 %v815
    %v817 = vand.u32 %v145, 4294901760
    %v818 = vsub.f32 %v145, %v817
    %819 = vmatpush1.msra.mxu0 %v818
    %v820 = vand.u32 %v148, 4294901760
    %v821 = vsub.f32 %v148, %v820
    %822 = vmatprep.subr.mxu0 %v821
    %v823 = vand.u32 %v147, 4294901760
    %v824 = vsub.f32 %v147, %v823
    %825 = vmatpush1.msra.mxu0 %v824
    %v826 = vand.u32 %v150, 4294901760
    %v827 = vsub.f32 %v150, %v826
    %828 = vmatprep.subr.mxu0 %v827
    %v829 = vand.u32 %v149, 4294901760
    %v830 = vsub.f32 %v149, %v829
    %831 = vmatpush1.msra.mxu0 %v830
    %v832 = vand.u32 %v152, 4294901760
    %v833 = vsub.f32 %v152, %v832
    %834 = vmatprep.subr.mxu0 %v833
    %v835 = vand.u32 %v151, 4294901760
    %v836 = vsub.f32 %v151, %v835
    %837 = vmatpush1.msra.mxu0 %v836
    %v838 = vand.u32 %v154, 4294901760
    %v839 = vsub.f32 %v154, %v838
    %840 = vmatprep.subr.mxu0 %v839
    %v841 = vand.u32 %v153, 4294901760
    %v842 = vsub.f32 %v153, %v841
    %843 = vmatpush1.msra.mxu0 %v842
    %v844 = vand.u32 %v156, 4294901760
    %v845 = vsub.f32 %v156, %v844
    %846 = vmatprep.subr.mxu0 %v845
    %v847 = vand.u32 %v155, 4294901760
    %v848 = vsub.f32 %v155, %v847
    %849 = vmatpush1.msra.mxu0 %v848
    %v850 = vand.u32 %v158, 4294901760
    %v851 = vsub.f32 %v158, %v850
    %852 = vmatprep.subr.mxu0 %v851
    %v853 = vand.u32 %v157, 4294901760
    %v854 = vsub.f32 %v157, %v853
    %855 = vmatpush1.msra.mxu0 %v854
    %v856 = vand.u32 %v160, 4294901760
    %v857 = vsub.f32 %v160, %v856
    %858 = vmatprep.subr.mxu0 %v857
    %v859 = vand.u32 %v159, 4294901760
    %v860 = vsub.f32 %v159, %v859
    %861 = vmatpush1.msra.mxu0 %v860
    %v862 = vand.u32 %v162, 4294901760
    %v863 = vsub.f32 %v162, %v862
    %864 = vmatprep.subr.mxu0 %v863
    %v865 = vand.u32 %v161, 4294901760
    %v866 = vsub.f32 %v161, %v865
    %867 = vmatpush1.msra.mxu0 %v866
    %v868 = vand.u32 %v164, 4294901760
    %v869 = vsub.f32 %v164, %v868
    %870 = vmatprep.subr.mxu0 %v869
    %v871 = vand.u32 %v163, 4294901760
    %v872 = vsub.f32 %v163, %v871
    %873 = vmatpush1.msra.mxu0 %v872
    %v874 = vand.u32 %v166, 4294901760
    %v875 = vsub.f32 %v166, %v874
    %876 = vmatprep.subr.mxu0 %v875
    %v877 = vand.u32 %v165, 4294901760
    %v878 = vsub.f32 %v165, %v877
    %879 = vmatpush1.msra.mxu0 %v878
    %v880 = vand.u32 %v168, 4294901760
    %v881 = vsub.f32 %v168, %v880
    %882 = vmatprep.subr.mxu0 %v881
    %v883 = vand.u32 %v167, 4294901760
    %v884 = vsub.f32 %v167, %v883
    %885 = vmatpush1.msra.mxu0 %v884
    %v886 = vand.u32 %v170, 4294901760
    %v887 = vsub.f32 %v170, %v886
    %888 = vmatprep.subr.mxu0 %v887
    %v889 = vand.u32 %v169, 4294901760
    %v890 = vsub.f32 %v169, %v889
    %891 = vmatpush1.msra.mxu0 %v890
    %v892 = vand.u32 %v172, 4294901760
    %v893 = vsub.f32 %v172, %v892
    %894 = vmatprep.subr.mxu0 %v893
    %v895 = vand.u32 %v171, 4294901760
    %v896 = vsub.f32 %v171, %v895
    %897 = vmatpush1.msra.mxu0 %v896
    %v898 = vand.u32 %v174, 4294901760
    %v899 = vsub.f32 %v174, %v898
    %900 = vmatprep.subr.mxu0 %v899
    %v901 = vand.u32 %v173, 4294901760
    %v902 = vsub.f32 %v173, %v901
    %903 = vmatpush1.msra.mxu0 %v902
    %v904 = vand.u32 %v176, 4294901760
    %v905 = vsub.f32 %v176, %v904
    %906 = vmatprep.subr.mxu0 %v905
    %v907 = vand.u32 %v175, 4294901760
    %v908 = vsub.f32 %v175, %v907
    %909 = vmatpush1.msra.mxu0 %v908
    %v910 = vand.u32 %v178, 4294901760
    %v911 = vsub.f32 %v178, %v910
    %912 = vmatprep.subr.mxu0 %v911
    %v913 = vand.u32 %v177, 4294901760
    %v914 = vsub.f32 %v177, %v913
    %915 = vmatpush1.msra.mxu0 %v914
    %v916 = vand.u32 %v180, 4294901760
    %v917 = vsub.f32 %v180, %v916
    %918 = vmatprep.subr.mxu0 %v917
    %v919 = vand.u32 %v179, 4294901760
    %v920 = vsub.f32 %v179, %v919
    %921 = vmatpush1.msra.mxu0 %v920
    %v922 = vand.u32 %v189, 4294901760
    %v923 = vsub.f32 %v189, %v922
    %924 = vmatprep.mubr.f32.mxu0 %v923
    %v925 = vand.u32 %v188, 4294901760
    %v926 = vsub.f32 %v188, %v925
    %927 = vmatmul.mubr.f32.gmra.mrb[0].mxu0 %v926
    %v928 = vpop.f32.mrb[0].mxu0
    %v929 = vadd.f32 %v726, %v928
    %v930 = vpop.f32.mrb[0].mxu0
    %v931 = vadd.f32 %v728, %v930
    %932 = vdwg.mxu0
    %v933 = vand.u32 %v118, 4294901760
    %934 = vmatprep.subr.mxu0 %v933
    %v935 = vand.u32 %v117, 4294901760
    %936 = vmatpush1.msra.mxu0 %v935
    %v937 = vand.u32 %v120, 4294901760
    %938 = vmatprep.subr.mxu0 %v937
    %v939 = vand.u32 %v119, 4294901760
    %940 = vmatpush1.msra.mxu0 %v939
    %v941 = vand.u32 %v122, 4294901760
    %942 = vmatprep.subr.mxu0 %v941
    %v943 = vand.u32 %v121, 4294901760
    %944 = vmatpush1.msra.mxu0 %v943
    %v945 = vand.u32 %v124, 4294901760
    %946 = vmatprep.subr.mxu0 %v945
    %v947 = vand.u32 %v123, 4294901760
    %948 = vmatpush1.msra.mxu0 %v947
    %v949 = vand.u32 %v126, 4294901760
    %950 = vmatprep.subr.mxu0 %v949
    %v951 = vand.u32 %v125, 4294901760
    %952 = vmatpush1.msra.mxu0 %v951
    %v953 = vand.u32 %v128, 4294901760
    %954 = vmatprep.subr.mxu0 %v953
    %v955 = vand.u32 %v127, 4294901760
    %956 = vmatpush1.msra.mxu0 %v955
    %v957 = vand.u32 %v130, 4294901760
    %958 = vmatprep.subr.mxu0 %v957
    %v959 = vand.u32 %v129, 4294901760
    %960 = vmatpush1.msra.mxu0 %v959
    %v961 = vand.u32 %v132, 4294901760
    %962 = vmatprep.subr.mxu0 %v961
    %v963 = vand.u32 %v131, 4294901760
    %964 = vmatpush1.msra.mxu0 %v963
    %v965 = vand.u32 %v134, 4294901760
    %966 = vmatprep.subr.mxu0 %v965
    %v967 = vand.u32 %v133, 4294901760
    %968 = vmatpush1.msra.mxu0 %v967
    %v969 = vand.u32 %v136, 4294901760
    %970 = vmatprep.subr.mxu0 %v969
    %v971 = vand.u32 %v135, 4294901760
    %972 = vmatpush1.msra.mxu0 %v971
    %v973 = vand.u32 %v138, 4294901760
    %974 = vmatprep.subr.mxu0 %v973
    %v975 = vand.u32 %v137, 4294901760
    %976 = vmatpush1.msra.mxu0 %v975
    %v977 = vand.u32 %v140, 4294901760
    %978 = vmatprep.subr.mxu0 %v977
    %v979 = vand.u32 %v139, 4294901760
    %980 = vmatpush1.msra.mxu0 %v979
    %v981 = vand.u32 %v142, 4294901760
    %982 = vmatprep.subr.mxu0 %v981
    %v983 = vand.u32 %v141, 4294901760
    %984 = vmatpush1.msra.mxu0 %v983
    %v985 = vand.u32 %v144, 4294901760
    %986 = vmatprep.subr.mxu0 %v985
    %v987 = vand.u32 %v143, 4294901760
    %988 = vmatpush1.msra.mxu0 %v987
    %v989 = vand.u32 %v146, 4294901760
    %990 = vmatprep.subr.mxu0 %v989
    %v991 = vand.u32 %v145, 4294901760
    %992 = vmatpush1.msra.mxu0 %v991
    %v993 = vand.u32 %v148, 4294901760
    %994 = vmatprep.subr.mxu0 %v993
    %v995 = vand.u32 %v147, 4294901760
    %996 = vmatpush1.msra.mxu0 %v995
    %v997 = vand.u32 %v150, 4294901760
    %998 = vmatprep.subr.mxu0 %v997
    %v999 = vand.u32 %v149, 4294901760
    %1000 = vmatpush1.msra.mxu0 %v999
    %v1001 = vand.u32 %v152, 4294901760
    %1002 = vmatprep.subr.mxu0 %v1001
    %v1003 = vand.u32 %v151, 4294901760
    %1004 = vmatpush1.msra.mxu0 %v1003
    %v1005 = vand.u32 %v154, 4294901760
    %1006 = vmatprep.subr.mxu0 %v1005
    %v1007 = vand.u32 %v153, 4294901760
    %1008 = vmatpush1.msra.mxu0 %v1007
    %v1009 = vand.u32 %v156, 4294901760
    %1010 = vmatprep.subr.mxu0 %v1009
    %v1011 = vand.u32 %v155, 4294901760
    %1012 = vmatpush1.msra.mxu0 %v1011
    %v1013 = vand.u32 %v158, 4294901760
    %1014 = vmatprep.subr.mxu0 %v1013
    %v1015 = vand.u32 %v157, 4294901760
    %1016 = vmatpush1.msra.mxu0 %v1015
    %v1017 = vand.u32 %v160, 4294901760
    %1018 = vmatprep.subr.mxu0 %v1017
    %v1019 = vand.u32 %v159, 4294901760
    %1020 = vmatpush1.msra.mxu0 %v1019
    %v1021 = vand.u32 %v162, 4294901760
    %1022 = vmatprep.subr.mxu0 %v1021
    %v1023 = vand.u32 %v161, 4294901760
    %1024 = vmatpush1.msra.mxu0 %v1023
    %v1025 = vand.u32 %v164, 4294901760
    %1026 = vmatprep.subr.mxu0 %v1025
    %v1027 = vand.u32 %v163, 4294901760
    %1028 = vmatpush1.msra.mxu0 %v1027
    %v1029 = vand.u32 %v166, 4294901760
    %1030 = vmatprep.subr.mxu0 %v1029
    %v1031 = vand.u32 %v165, 4294901760
    %1032 = vmatpush1.msra.mxu0 %v1031
    %v1033 = vand.u32 %v168, 4294901760
    %1034 = vmatprep.subr.mxu0 %v1033
    %v1035 = vand.u32 %v167, 4294901760
    %1036 = vmatpush1.msra.mxu0 %v1035
    %v1037 = vand.u32 %v170, 4294901760
    %1038 = vmatprep.subr.mxu0 %v1037
    %v1039 = vand.u32 %v169, 4294901760
    %1040 = vmatpush1.msra.mxu0 %v1039
    %v1041 = vand.u32 %v172, 4294901760
    %1042 = vmatprep.subr.mxu0 %v1041
    %v1043 = vand.u32 %v171, 4294901760
    %1044 = vmatpush1.msra.mxu0 %v1043
    %v1045 = vand.u32 %v174, 4294901760
    %1046 = vmatprep.subr.mxu0 %v1045
    %v1047 = vand.u32 %v173, 4294901760
    %1048 = vmatpush1.msra.mxu0 %v1047
    %v1049 = vand.u32 %v176, 4294901760
    %1050 = vmatprep.subr.mxu0 %v1049
    %v1051 = vand.u32 %v175, 4294901760
    %1052 = vmatpush1.msra.mxu0 %v1051
    %v1053 = vand.u32 %v178, 4294901760
    %1054 = vmatprep.subr.mxu0 %v1053
    %v1055 = vand.u32 %v177, 4294901760
    %1056 = vmatpush1.msra.mxu0 %v1055
    %v1057 = vand.u32 %v180, 4294901760
    %1058 = vmatprep.subr.mxu0 %v1057
    %v1059 = vand.u32 %v179, 4294901760
    %1060 = vmatpush1.msra.mxu0 %v1059
    %v1061 = vand.u32 %v189, 4294901760
    %v1062 = vsub.f32 %v189, %v1061
    %v1063 = vand.u32 %v1062, 4294901760
    %1064 = vmatprep.mubr.f32.mxu0 %v1063
    %v1065 = vand.u32 %v188, 4294901760
    %v1066 = vsub.f32 %v188, %v1065
    %v1067 = vand.u32 %v1066, 4294901760
    %1068 = vmatmul.mubr.f32.gmra.mrb[0].mxu0 %v1067
    %v1069 = vpop.f32.mrb[0].mxu0
    %v1070 = vadd.f32 %v929, %v1069
    %v1071 = vpop.f32.mrb[0].mxu0
    %v1072 = vadd.f32 %v931, %v1071
    %1073 = vdwg.mxu0
    %v1074 = vand.u32 %v118, 4294901760
    %v1075 = vsub.f32 %v118, %v1074
    %v1076 = vand.u32 %v1075, 4294901760
    %1077 = vmatprep.subr.mxu0 %v1076
    %v1078 = vand.u32 %v117, 4294901760
    %v1079 = vsub.f32 %v117, %v1078
    %v1080 = vand.u32 %v1079, 4294901760
    %1081 = vmatpush1.msra.mxu0 %v1080
    %v1082 = vand.u32 %v120, 4294901760
    %v1083 = vsub.f32 %v120, %v1082
    %v1084 = vand.u32 %v1083, 4294901760
    %1085 = vmatprep.subr.mxu0 %v1084
    %v1086 = vand.u32 %v119, 4294901760
    %v1087 = vsub.f32 %v119, %v1086
    %v1088 = vand.u32 %v1087, 4294901760
    %1089 = vmatpush1.msra.mxu0 %v1088
    %v1090 = vand.u32 %v122, 4294901760
    %v1091 = vsub.f32 %v122, %v1090
    %v1092 = vand.u32 %v1091, 4294901760
    %1093 = vmatprep.subr.mxu0 %v1092
    %v1094 = vand.u32 %v121, 4294901760
    %v1095 = vsub.f32 %v121, %v1094
    %v1096 = vand.u32 %v1095, 4294901760
    %1097 = vmatpush1.msra.mxu0 %v1096
    %v1098 = vand.u32 %v124, 4294901760
    %v1099 = vsub.f32 %v124, %v1098
    %v1100 = vand.u32 %v1099, 4294901760
    %1101 = vmatprep.subr.mxu0 %v1100
    %v1102 = vand.u32 %v123, 4294901760
    %v1103 = vsub.f32 %v123, %v1102
    %v1104 = vand.u32 %v1103, 4294901760
    %1105 = vmatpush1.msra.mxu0 %v1104
    %v1106 = vand.u32 %v126, 4294901760
    %v1107 = vsub.f32 %v126, %v1106
    %v1108 = vand.u32 %v1107, 4294901760
    %1109 = vmatprep.subr.mxu0 %v1108
    %v1110 = vand.u32 %v125, 4294901760
    %v1111 = vsub.f32 %v125, %v1110
    %v1112 = vand.u32 %v1111, 4294901760
    %1113 = vmatpush1.msra.mxu0 %v1112
    %v1114 = vand.u32 %v128, 4294901760
    %v1115 = vsub.f32 %v128, %v1114
    %v1116 = vand.u32 %v1115, 4294901760
    %1117 = vmatprep.subr.mxu0 %v1116
    %v1118 = vand.u32 %v127, 4294901760
    %v1119 = vsub.f32 %v127, %v1118
    %v1120 = vand.u32 %v1119, 4294901760
    %1121 = vmatpush1.msra.mxu0 %v1120
    %v1122 = vand.u32 %v130, 4294901760
    %v1123 = vsub.f32 %v130, %v1122
    %v1124 = vand.u32 %v1123, 4294901760
    %1125 = vmatprep.subr.mxu0 %v1124
    %v1126 = vand.u32 %v129, 4294901760
    %v1127 = vsub.f32 %v129, %v1126
    %v1128 = vand.u32 %v1127, 4294901760
    %1129 = vmatpush1.msra.mxu0 %v1128
    %v1130 = vand.u32 %v132, 4294901760
    %v1131 = vsub.f32 %v132, %v1130
    %v1132 = vand.u32 %v1131, 4294901760
    %1133 = vmatprep.subr.mxu0 %v1132
    %v1134 = vand.u32 %v131, 4294901760
    %v1135 = vsub.f32 %v131, %v1134
    %v1136 = vand.u32 %v1135, 4294901760
    %1137 = vmatpush1.msra.mxu0 %v1136
    %v1138 = vand.u32 %v134, 4294901760
    %v1139 = vsub.f32 %v134, %v1138
    %v1140 = vand.u32 %v1139, 4294901760
    %1141 = vmatprep.subr.mxu0 %v1140
    %v1142 = vand.u32 %v133, 4294901760
    %v1143 = vsub.f32 %v133, %v1142
    %v1144 = vand.u32 %v1143, 4294901760
    %1145 = vmatpush1.msra.mxu0 %v1144
    %v1146 = vand.u32 %v136, 4294901760
    %v1147 = vsub.f32 %v136, %v1146
    %v1148 = vand.u32 %v1147, 4294901760
    %1149 = vmatprep.subr.mxu0 %v1148
    %v1150 = vand.u32 %v135, 4294901760
    %v1151 = vsub.f32 %v135, %v1150
    %v1152 = vand.u32 %v1151, 4294901760
    %1153 = vmatpush1.msra.mxu0 %v1152
    %v1154 = vand.u32 %v138, 4294901760
    %v1155 = vsub.f32 %v138, %v1154
    %v1156 = vand.u32 %v1155, 4294901760
    %1157 = vmatprep.subr.mxu0 %v1156
    %v1158 = vand.u32 %v137, 4294901760
    %v1159 = vsub.f32 %v137, %v1158
    %v1160 = vand.u32 %v1159, 4294901760
    %1161 = vmatpush1.msra.mxu0 %v1160
    %v1162 = vand.u32 %v140, 4294901760
    %v1163 = vsub.f32 %v140, %v1162
    %v1164 = vand.u32 %v1163, 4294901760
    %1165 = vmatprep.subr.mxu0 %v1164
    %v1166 = vand.u32 %v139, 4294901760
    %v1167 = vsub.f32 %v139, %v1166
    %v1168 = vand.u32 %v1167, 4294901760
    %1169 = vmatpush1.msra.mxu0 %v1168
    %v1170 = vand.u32 %v142, 4294901760
    %v1171 = vsub.f32 %v142, %v1170
    %v1172 = vand.u32 %v1171, 4294901760
    %1173 = vmatprep.subr.mxu0 %v1172
    %v1174 = vand.u32 %v141, 4294901760
    %v1175 = vsub.f32 %v141, %v1174
    %v1176 = vand.u32 %v1175, 4294901760
    %1177 = vmatpush1.msra.mxu0 %v1176
    %v1178 = vand.u32 %v144, 4294901760
    %v1179 = vsub.f32 %v144, %v1178
    %v1180 = vand.u32 %v1179, 4294901760
    %1181 = vmatprep.subr.mxu0 %v1180
    %v1182 = vand.u32 %v143, 4294901760
    %v1183 = vsub.f32 %v143, %v1182
    %v1184 = vand.u32 %v1183, 4294901760
    %1185 = vmatpush1.msra.mxu0 %v1184
    %v1186 = vand.u32 %v146, 4294901760
    %v1187 = vsub.f32 %v146, %v1186
    %v1188 = vand.u32 %v1187, 4294901760
    %1189 = vmatprep.subr.mxu0 %v1188
    %v1190 = vand.u32 %v145, 4294901760
    %v1191 = vsub.f32 %v145, %v1190
    %v1192 = vand.u32 %v1191, 4294901760
    %1193 = vmatpush1.msra.mxu0 %v1192
    %v1194 = vand.u32 %v148, 4294901760
    %v1195 = vsub.f32 %v148, %v1194
    %v1196 = vand.u32 %v1195, 4294901760
    %1197 = vmatprep.subr.mxu0 %v1196
    %v1198 = vand.u32 %v147, 4294901760
    %v1199 = vsub.f32 %v147, %v1198
    %v1200 = vand.u32 %v1199, 4294901760
    %1201 = vmatpush1.msra.mxu0 %v1200
    %v1202 = vand.u32 %v150, 4294901760
    %v1203 = vsub.f32 %v150, %v1202
    %v1204 = vand.u32 %v1203, 4294901760
    %1205 = vmatprep.subr.mxu0 %v1204
    %v1206 = vand.u32 %v149, 4294901760
    %v1207 = vsub.f32 %v149, %v1206
    %v1208 = vand.u32 %v1207, 4294901760
    %1209 = vmatpush1.msra.mxu0 %v1208
    %v1210 = vand.u32 %v152, 4294901760
    %v1211 = vsub.f32 %v152, %v1210
    %v1212 = vand.u32 %v1211, 4294901760
    %1213 = vmatprep.subr.mxu0 %v1212
    %v1214 = vand.u32 %v151, 4294901760
    %v1215 = vsub.f32 %v151, %v1214
    %v1216 = vand.u32 %v1215, 4294901760
    %1217 = vmatpush1.msra.mxu0 %v1216
    %v1218 = vand.u32 %v154, 4294901760
    %v1219 = vsub.f32 %v154, %v1218
    %v1220 = vand.u32 %v1219, 4294901760
    %1221 = vmatprep.subr.mxu0 %v1220
    %v1222 = vand.u32 %v153, 4294901760
    %v1223 = vsub.f32 %v153, %v1222
    %v1224 = vand.u32 %v1223, 4294901760
    %1225 = vmatpush1.msra.mxu0 %v1224
    %v1226 = vand.u32 %v156, 4294901760
    %v1227 = vsub.f32 %v156, %v1226
    %v1228 = vand.u32 %v1227, 4294901760
    %1229 = vmatprep.subr.mxu0 %v1228
    %v1230 = vand.u32 %v155, 4294901760
    %v1231 = vsub.f32 %v155, %v1230
    %v1232 = vand.u32 %v1231, 4294901760
    %1233 = vmatpush1.msra.mxu0 %v1232
    %v1234 = vand.u32 %v158, 4294901760
    %v1235 = vsub.f32 %v158, %v1234
    %v1236 = vand.u32 %v1235, 4294901760
    %1237 = vmatprep.subr.mxu0 %v1236
    %v1238 = vand.u32 %v157, 4294901760
    %v1239 = vsub.f32 %v157, %v1238
    %v1240 = vand.u32 %v1239, 4294901760
    %1241 = vmatpush1.msra.mxu0 %v1240
    %v1242 = vand.u32 %v160, 4294901760
    %v1243 = vsub.f32 %v160, %v1242
    %v1244 = vand.u32 %v1243, 4294901760
    %1245 = vmatprep.subr.mxu0 %v1244
    %v1246 = vand.u32 %v159, 4294901760
    %v1247 = vsub.f32 %v159, %v1246
    %v1248 = vand.u32 %v1247, 4294901760
    %1249 = vmatpush1.msra.mxu0 %v1248
    %v1250 = vand.u32 %v162, 4294901760
    %v1251 = vsub.f32 %v162, %v1250
    %v1252 = vand.u32 %v1251, 4294901760
    %1253 = vmatprep.subr.mxu0 %v1252
    %v1254 = vand.u32 %v161, 4294901760
    %v1255 = vsub.f32 %v161, %v1254
    %v1256 = vand.u32 %v1255, 4294901760
    %1257 = vmatpush1.msra.mxu0 %v1256
    %v1258 = vand.u32 %v164, 4294901760
    %v1259 = vsub.f32 %v164, %v1258
    %v1260 = vand.u32 %v1259, 4294901760
    %1261 = vmatprep.subr.mxu0 %v1260
    %v1262 = vand.u32 %v163, 4294901760
    %v1263 = vsub.f32 %v163, %v1262
    %v1264 = vand.u32 %v1263, 4294901760
    %1265 = vmatpush1.msra.mxu0 %v1264
    %v1266 = vand.u32 %v166, 4294901760
    %v1267 = vsub.f32 %v166, %v1266
    %v1268 = vand.u32 %v1267, 4294901760
    %1269 = vmatprep.subr.mxu0 %v1268
    %v1270 = vand.u32 %v165, 4294901760
    %v1271 = vsub.f32 %v165, %v1270
    %v1272 = vand.u32 %v1271, 4294901760
    %1273 = vmatpush1.msra.mxu0 %v1272
    %v1274 = vand.u32 %v168, 4294901760
    %v1275 = vsub.f32 %v168, %v1274
    %v1276 = vand.u32 %v1275, 4294901760
    %1277 = vmatprep.subr.mxu0 %v1276
    %v1278 = vand.u32 %v167, 4294901760
    %v1279 = vsub.f32 %v167, %v1278
    %v1280 = vand.u32 %v1279, 4294901760
    %1281 = vmatpush1.msra.mxu0 %v1280
    %v1282 = vand.u32 %v170, 4294901760
    %v1283 = vsub.f32 %v170, %v1282
    %v1284 = vand.u32 %v1283, 4294901760
    %1285 = vmatprep.subr.mxu0 %v1284
    %v1286 = vand.u32 %v169, 4294901760
    %v1287 = vsub.f32 %v169, %v1286
    %v1288 = vand.u32 %v1287, 4294901760
    %1289 = vmatpush1.msra.mxu0 %v1288
    %v1290 = vand.u32 %v172, 4294901760
    %v1291 = vsub.f32 %v172, %v1290
    %v1292 = vand.u32 %v1291, 4294901760
    %1293 = vmatprep.subr.mxu0 %v1292
    %v1294 = vand.u32 %v171, 4294901760
    %v1295 = vsub.f32 %v171, %v1294
    %v1296 = vand.u32 %v1295, 4294901760
    %1297 = vmatpush1.msra.mxu0 %v1296
    %v1298 = vand.u32 %v174, 4294901760
    %v1299 = vsub.f32 %v174, %v1298
    %v1300 = vand.u32 %v1299, 4294901760
    %1301 = vmatprep.subr.mxu0 %v1300
    %v1302 = vand.u32 %v173, 4294901760
    %v1303 = vsub.f32 %v173, %v1302
    %v1304 = vand.u32 %v1303, 4294901760
    %1305 = vmatpush1.msra.mxu0 %v1304
    %v1306 = vand.u32 %v176, 4294901760
    %v1307 = vsub.f32 %v176, %v1306
    %v1308 = vand.u32 %v1307, 4294901760
    %1309 = vmatprep.subr.mxu0 %v1308
    %v1310 = vand.u32 %v175, 4294901760
    %v1311 = vsub.f32 %v175, %v1310
    %v1312 = vand.u32 %v1311, 4294901760
    %1313 = vmatpush1.msra.mxu0 %v1312
    %v1314 = vand.u32 %v178, 4294901760
    %v1315 = vsub.f32 %v178, %v1314
    %v1316 = vand.u32 %v1315, 4294901760
    %1317 = vmatprep.subr.mxu0 %v1316
    %v1318 = vand.u32 %v177, 4294901760
    %v1319 = vsub.f32 %v177, %v1318
    %v1320 = vand.u32 %v1319, 4294901760
    %1321 = vmatpush1.msra.mxu0 %v1320
    %v1322 = vand.u32 %v180, 4294901760
    %v1323 = vsub.f32 %v180, %v1322
    %v1324 = vand.u32 %v1323, 4294901760
    %1325 = vmatprep.subr.mxu0 %v1324
    %v1326 = vand.u32 %v179, 4294901760
    %v1327 = vsub.f32 %v179, %v1326
    %v1328 = vand.u32 %v1327, 4294901760
    %1329 = vmatpush1.msra.mxu0 %v1328
    %v1330 = vand.u32 %v189, 4294901760
    %1331 = vmatprep.mubr.f32.mxu0 %v1330
    %v1332 = vand.u32 %v188, 4294901760
    %1333 = vmatmul.mubr.f32.gmra.mrb[0].mxu0 %v1332
    %v1334 = vpop.f32.mrb[0].mxu0
    %v1335 = vadd.f32 %v1070, %v1334
    %v1336 = vpop.f32.mrb[0].mxu0
    %v1337 = vadd.f32 %v1072, %v1336
    %1338 = vdwg.mxu0
    %v1339 = vand.u32 %v118, 4294901760
    %1340 = vmatprep.subr.mxu0 %v1339
    %v1341 = vand.u32 %v117, 4294901760
    %1342 = vmatpush1.msra.mxu0 %v1341
    %v1343 = vand.u32 %v120, 4294901760
    %1344 = vmatprep.subr.mxu0 %v1343
    %v1345 = vand.u32 %v119, 4294901760
    %1346 = vmatpush1.msra.mxu0 %v1345
    %v1347 = vand.u32 %v122, 4294901760
    %1348 = vmatprep.subr.mxu0 %v1347
    %v1349 = vand.u32 %v121, 4294901760
    %1350 = vmatpush1.msra.mxu0 %v1349
    %v1351 = vand.u32 %v124, 4294901760
    %1352 = vmatprep.subr.mxu0 %v1351
    %v1353 = vand.u32 %v123, 4294901760
    %1354 = vmatpush1.msra.mxu0 %v1353
    %v1355 = vand.u32 %v126, 4294901760
    %1356 = vmatprep.subr.mxu0 %v1355
    %v1357 = vand.u32 %v125, 4294901760
    %1358 = vmatpush1.msra.mxu0 %v1357
    %v1359 = vand.u32 %v128, 4294901760
    %1360 = vmatprep.subr.mxu0 %v1359
    %v1361 = vand.u32 %v127, 4294901760
    %1362 = vmatpush1.msra.mxu0 %v1361
    %v1363 = vand.u32 %v130, 4294901760
    %1364 = vmatprep.subr.mxu0 %v1363
    %v1365 = vand.u32 %v129, 4294901760
    %1366 = vmatpush1.msra.mxu0 %v1365
    %v1367 = vand.u32 %v132, 4294901760
    %1368 = vmatprep.subr.mxu0 %v1367
    %v1369 = vand.u32 %v131, 4294901760
    %1370 = vmatpush1.msra.mxu0 %v1369
    %v1371 = vand.u32 %v134, 4294901760
    %1372 = vmatprep.subr.mxu0 %v1371
    %v1373 = vand.u32 %v133, 4294901760
    %1374 = vmatpush1.msra.mxu0 %v1373
    %v1375 = vand.u32 %v136, 4294901760
    %1376 = vmatprep.subr.mxu0 %v1375
    %v1377 = vand.u32 %v135, 4294901760
    %1378 = vmatpush1.msra.mxu0 %v1377
    %v1379 = vand.u32 %v138, 4294901760
    %1380 = vmatprep.subr.mxu0 %v1379
    %v1381 = vand.u32 %v137, 4294901760
    %1382 = vmatpush1.msra.mxu0 %v1381
    %v1383 = vand.u32 %v140, 4294901760
    %1384 = vmatprep.subr.mxu0 %v1383
    %v1385 = vand.u32 %v139, 4294901760
    %1386 = vmatpush1.msra.mxu0 %v1385
    %v1387 = vand.u32 %v142, 4294901760
    %1388 = vmatprep.subr.mxu0 %v1387
    %v1389 = vand.u32 %v141, 4294901760
    %1390 = vmatpush1.msra.mxu0 %v1389
    %v1391 = vand.u32 %v144, 4294901760
    %1392 = vmatprep.subr.mxu0 %v1391
    %v1393 = vand.u32 %v143, 4294901760
    %1394 = vmatpush1.msra.mxu0 %v1393
    %v1395 = vand.u32 %v146, 4294901760
    %1396 = vmatprep.subr.mxu0 %v1395
    %v1397 = vand.u32 %v145, 4294901760
    %1398 = vmatpush1.msra.mxu0 %v1397
    %v1399 = vand.u32 %v148, 4294901760
    %1400 = vmatprep.subr.mxu0 %v1399
    %v1401 = vand.u32 %v147, 4294901760
    %1402 = vmatpush1.msra.mxu0 %v1401
    %v1403 = vand.u32 %v150, 4294901760
    %1404 = vmatprep.subr.mxu0 %v1403
    %v1405 = vand.u32 %v149, 4294901760
    %1406 = vmatpush1.msra.mxu0 %v1405
    %v1407 = vand.u32 %v152, 4294901760
    %1408 = vmatprep.subr.mxu0 %v1407
    %v1409 = vand.u32 %v151, 4294901760
    %1410 = vmatpush1.msra.mxu0 %v1409
    %v1411 = vand.u32 %v154, 4294901760
    %1412 = vmatprep.subr.mxu0 %v1411
    %v1413 = vand.u32 %v153, 4294901760
    %1414 = vmatpush1.msra.mxu0 %v1413
    %v1415 = vand.u32 %v156, 4294901760
    %1416 = vmatprep.subr.mxu0 %v1415
    %v1417 = vand.u32 %v155, 4294901760
    %1418 = vmatpush1.msra.mxu0 %v1417
    %v1419 = vand.u32 %v158, 4294901760
    %1420 = vmatprep.subr.mxu0 %v1419
    %v1421 = vand.u32 %v157, 4294901760
    %1422 = vmatpush1.msra.mxu0 %v1421
    %v1423 = vand.u32 %v160, 4294901760
    %1424 = vmatprep.subr.mxu0 %v1423
    %v1425 = vand.u32 %v159, 4294901760
    %1426 = vmatpush1.msra.mxu0 %v1425
    %v1427 = vand.u32 %v162, 4294901760
    %1428 = vmatprep.subr.mxu0 %v1427
    %v1429 = vand.u32 %v161, 4294901760
    %1430 = vmatpush1.msra.mxu0 %v1429
    %v1431 = vand.u32 %v164, 4294901760
    %1432 = vmatprep.subr.mxu0 %v1431
    %v1433 = vand.u32 %v163, 4294901760
    %1434 = vmatpush1.msra.mxu0 %v1433
    %v1435 = vand.u32 %v166, 4294901760
    %1436 = vmatprep.subr.mxu0 %v1435
    %v1437 = vand.u32 %v165, 4294901760
    %1438 = vmatpush1.msra.mxu0 %v1437
    %v1439 = vand.u32 %v168, 4294901760
    %1440 = vmatprep.subr.mxu0 %v1439
    %v1441 = vand.u32 %v167, 4294901760
    %1442 = vmatpush1.msra.mxu0 %v1441
    %v1443 = vand.u32 %v170, 4294901760
    %1444 = vmatprep.subr.mxu0 %v1443
    %v1445 = vand.u32 %v169, 4294901760
    %1446 = vmatpush1.msra.mxu0 %v1445
    %v1447 = vand.u32 %v172, 4294901760
    %1448 = vmatprep.subr.mxu0 %v1447
    %v1449 = vand.u32 %v171, 4294901760
    %1450 = vmatpush1.msra.mxu0 %v1449
    %v1451 = vand.u32 %v174, 4294901760
    %1452 = vmatprep.subr.mxu0 %v1451
    %v1453 = vand.u32 %v173, 4294901760
    %1454 = vmatpush1.msra.mxu0 %v1453
    %v1455 = vand.u32 %v176, 4294901760
    %1456 = vmatprep.subr.mxu0 %v1455
    %v1457 = vand.u32 %v175, 4294901760
    %1458 = vmatpush1.msra.mxu0 %v1457
    %v1459 = vand.u32 %v178, 4294901760
    %1460 = vmatprep.subr.mxu0 %v1459
    %v1461 = vand.u32 %v177, 4294901760
    %1462 = vmatpush1.msra.mxu0 %v1461
    %v1463 = vand.u32 %v180, 4294901760
    %1464 = vmatprep.subr.mxu0 %v1463
    %v1465 = vand.u32 %v179, 4294901760
    %1466 = vmatpush1.msra.mxu0 %v1465
    %v1467 = vand.u32 %v189, 4294901760
    %1468 = vmatprep.mubr.f32.mxu0 %v1467
    %v1469 = vand.u32 %v188, 4294901760
    %1470 = vmatmul.mubr.f32.gmra.mrb[0].mxu0 %v1469
    %v1471 = vpop.f32.mrb[0].mxu0
    %v1472 = vadd.f32 %v1335, %v1471
    %v1473 = vpop.f32.mrb[0].mxu0
    %v1474 = vadd.f32 %v1337, %v1473
    %1475 = vdwg.mxu0
    %v1478 = vunpack.c.l.s4 1983009808
    %v1479 = vunpack.c.0.s8 %v1478
    %v1480 = vlaneseq
    %v1481 = vshrl.u32 %v1480, 7
    %v1482 = vsub.s32 %v1479, %v1481
    %v1483 = vrot.slane %v52, %v1482
    %v1484 = vcombine.high %v1483, %v1483
    %v1487 = vand.u32 %v54, 4294901760
    %1488 = vmatprep.subr.mxu0 %v1487
    %v1489 = vand.u32 %v53, 4294901760
    %1490 = vmatpush1.msra.mxu0 %v1489
    %v1491 = vand.u32 %v56, 4294901760
    %1492 = vmatprep.subr.mxu0 %v1491
    %v1493 = vand.u32 %v55, 4294901760
    %1494 = vmatpush1.msra.mxu0 %v1493
    %v1495 = vand.u32 %v58, 4294901760
    %1496 = vmatprep.subr.mxu0 %v1495
    %v1497 = vand.u32 %v57, 4294901760
    %1498 = vmatpush1.msra.mxu0 %v1497
    %v1499 = vand.u32 %v60, 4294901760
    %1500 = vmatprep.subr.mxu0 %v1499
    %v1501 = vand.u32 %v59, 4294901760
    %1502 = vmatpush1.msra.mxu0 %v1501
    %v1503 = vand.u32 %v62, 4294901760
    %1504 = vmatprep.subr.mxu0 %v1503
    %v1505 = vand.u32 %v61, 4294901760
    %1506 = vmatpush1.msra.mxu0 %v1505
    %v1507 = vand.u32 %v64, 4294901760
    %1508 = vmatprep.subr.mxu0 %v1507
    %v1509 = vand.u32 %v63, 4294901760
    %1510 = vmatpush1.msra.mxu0 %v1509
    %v1511 = vand.u32 %v66, 4294901760
    %1512 = vmatprep.subr.mxu0 %v1511
    %v1513 = vand.u32 %v65, 4294901760
    %1514 = vmatpush1.msra.mxu0 %v1513
    %v1515 = vand.u32 %v68, 4294901760
    %1516 = vmatprep.subr.mxu0 %v1515
    %v1517 = vand.u32 %v67, 4294901760
    %1518 = vmatpush1.msra.mxu0 %v1517
    %v1519 = vand.u32 %v70, 4294901760
    %1520 = vmatprep.subr.mxu0 %v1519
    %v1521 = vand.u32 %v69, 4294901760
    %1522 = vmatpush1.msra.mxu0 %v1521
    %v1523 = vand.u32 %v72, 4294901760
    %1524 = vmatprep.subr.mxu0 %v1523
    %v1525 = vand.u32 %v71, 4294901760
    %1526 = vmatpush1.msra.mxu0 %v1525
    %v1527 = vand.u32 %v74, 4294901760
    %1528 = vmatprep.subr.mxu0 %v1527
    %v1529 = vand.u32 %v73, 4294901760
    %1530 = vmatpush1.msra.mxu0 %v1529
    %v1531 = vand.u32 %v76, 4294901760
    %1532 = vmatprep.subr.mxu0 %v1531
    %v1533 = vand.u32 %v75, 4294901760
    %1534 = vmatpush1.msra.mxu0 %v1533
    %v1535 = vand.u32 %v78, 4294901760
    %1536 = vmatprep.subr.mxu0 %v1535
    %v1537 = vand.u32 %v77, 4294901760
    %1538 = vmatpush1.msra.mxu0 %v1537
    %v1539 = vand.u32 %v80, 4294901760
    %1540 = vmatprep.subr.mxu0 %v1539
    %v1541 = vand.u32 %v79, 4294901760
    %1542 = vmatpush1.msra.mxu0 %v1541
    %v1543 = vand.u32 %v82, 4294901760
    %1544 = vmatprep.subr.mxu0 %v1543
    %v1545 = vand.u32 %v81, 4294901760
    %1546 = vmatpush1.msra.mxu0 %v1545
    %v1547 = vand.u32 %v84, 4294901760
    %1548 = vmatprep.subr.mxu0 %v1547
    %v1549 = vand.u32 %v83, 4294901760
    %1550 = vmatpush1.msra.mxu0 %v1549
    %v1551 = vand.u32 %v86, 4294901760
    %1552 = vmatprep.subr.mxu0 %v1551
    %v1553 = vand.u32 %v85, 4294901760
    %1554 = vmatpush1.msra.mxu0 %v1553
    %v1555 = vand.u32 %v88, 4294901760
    %1556 = vmatprep.subr.mxu0 %v1555
    %v1557 = vand.u32 %v87, 4294901760
    %1558 = vmatpush1.msra.mxu0 %v1557
    %v1559 = vand.u32 %v90, 4294901760
    %1560 = vmatprep.subr.mxu0 %v1559
    %v1561 = vand.u32 %v89, 4294901760
    %1562 = vmatpush1.msra.mxu0 %v1561
    %v1563 = vand.u32 %v92, 4294901760
    %1564 = vmatprep.subr.mxu0 %v1563
    %v1565 = vand.u32 %v91, 4294901760
    %1566 = vmatpush1.msra.mxu0 %v1565
    %v1567 = vand.u32 %v94, 4294901760
    %1568 = vmatprep.subr.mxu0 %v1567
    %v1569 = vand.u32 %v93, 4294901760
    %1570 = vmatpush1.msra.mxu0 %v1569
    %v1571 = vand.u32 %v96, 4294901760
    %1572 = vmatprep.subr.mxu0 %v1571
    %v1573 = vand.u32 %v95, 4294901760
    %1574 = vmatpush1.msra.mxu0 %v1573
    %v1575 = vand.u32 %v98, 4294901760
    %1576 = vmatprep.subr.mxu0 %v1575
    %v1577 = vand.u32 %v97, 4294901760
    %1578 = vmatpush1.msra.mxu0 %v1577
    %v1579 = vand.u32 %v100, 4294901760
    %1580 = vmatprep.subr.mxu0 %v1579
    %v1581 = vand.u32 %v99, 4294901760
    %1582 = vmatpush1.msra.mxu0 %v1581
    %v1583 = vand.u32 %v102, 4294901760
    %1584 = vmatprep.subr.mxu0 %v1583
    %v1585 = vand.u32 %v101, 4294901760
    %1586 = vmatpush1.msra.mxu0 %v1585
    %v1587 = vand.u32 %v104, 4294901760
    %1588 = vmatprep.subr.mxu0 %v1587
    %v1589 = vand.u32 %v103, 4294901760
    %1590 = vmatpush1.msra.mxu0 %v1589
    %v1591 = vand.u32 %v106, 4294901760
    %1592 = vmatprep.subr.mxu0 %v1591
    %v1593 = vand.u32 %v105, 4294901760
    %1594 = vmatpush1.msra.mxu0 %v1593
    %v1595 = vand.u32 %v108, 4294901760
    %1596 = vmatprep.subr.mxu0 %v1595
    %v1597 = vand.u32 %v107, 4294901760
    %1598 = vmatpush1.msra.mxu0 %v1597
    %v1599 = vand.u32 %v110, 4294901760
    %1600 = vmatprep.subr.mxu0 %v1599
    %v1601 = vand.u32 %v109, 4294901760
    %1602 = vmatpush1.msra.mxu0 %v1601
    %v1603 = vand.u32 %v112, 4294901760
    %1604 = vmatprep.subr.mxu0 %v1603
    %v1605 = vand.u32 %v111, 4294901760
    %1606 = vmatpush1.msra.mxu0 %v1605
    %v1607 = vand.u32 %v114, 4294901760
    %1608 = vmatprep.subr.mxu0 %v1607
    %v1609 = vand.u32 %v113, 4294901760
    %1610 = vmatpush1.msra.mxu0 %v1609
    %v1611 = vand.u32 %v116, 4294901760
    %1612 = vmatprep.subr.mxu0 %v1611
    %v1613 = vand.u32 %v115, 4294901760
    %1614 = vmatpush1.msra.mxu0 %v1613
    %v1615 = vand.u32 %v1484, 4294901760
    %v1616 = vsub.f32 %v1484, %v1615
    %v1617 = vand.u32 %v1616, 4294901760
    %v1618 = vsub.f32 %v1616, %v1617
    %v1619 = vand.u32 %v1618, 4294901760
    %1620 = vmatprep.mubr.f32.mxu0 %v1619
    %v1621 = vand.u32 %v1483, 4294901760
    %v1622 = vsub.f32 %v1483, %v1621
    %v1623 = vand.u32 %v1622, 4294901760
    %v1624 = vsub.f32 %v1622, %v1623
    %v1625 = vand.u32 %v1624, 4294901760
    %1626 = vmatmul.mubr.f32.gmra.mrb[0].mxu0 %v1625
    %v1627 = vpop.f32.mrb[0].mxu0
    %v1628 = vadd.f32 %v1472, %v1627
    %v1629 = vpop.f32.mrb[0].mxu0
    %v1630 = vadd.f32 %v1474, %v1629
    %1631 = vdwg.mxu0
    %v1632 = vand.u32 %v54, 4294901760
    %v1633 = vsub.f32 %v54, %v1632
    %v1634 = vand.u32 %v1633, 4294901760
    %v1635 = vsub.f32 %v1633, %v1634
    %v1636 = vand.u32 %v1635, 4294901760
    %1637 = vmatprep.subr.mxu0 %v1636
    %v1638 = vand.u32 %v53, 4294901760
    %v1639 = vsub.f32 %v53, %v1638
    %v1640 = vand.u32 %v1639, 4294901760
    %v1641 = vsub.f32 %v1639, %v1640
    %v1642 = vand.u32 %v1641, 4294901760
    %1643 = vmatpush1.msra.mxu0 %v1642
    %v1644 = vand.u32 %v56, 4294901760
    %v1645 = vsub.f32 %v56, %v1644
    %v1646 = vand.u32 %v1645, 4294901760
    %v1647 = vsub.f32 %v1645, %v1646
    %v1648 = vand.u32 %v1647, 4294901760
    %1649 = vmatprep.subr.mxu0 %v1648
    %v1650 = vand.u32 %v55, 4294901760
    %v1651 = vsub.f32 %v55, %v1650
    %v1652 = vand.u32 %v1651, 4294901760
    %v1653 = vsub.f32 %v1651, %v1652
    %v1654 = vand.u32 %v1653, 4294901760
    %1655 = vmatpush1.msra.mxu0 %v1654
    %v1656 = vand.u32 %v58, 4294901760
    %v1657 = vsub.f32 %v58, %v1656
    %v1658 = vand.u32 %v1657, 4294901760
    %v1659 = vsub.f32 %v1657, %v1658
    %v1660 = vand.u32 %v1659, 4294901760
    %1661 = vmatprep.subr.mxu0 %v1660
    %v1662 = vand.u32 %v57, 4294901760
    %v1663 = vsub.f32 %v57, %v1662
    %v1664 = vand.u32 %v1663, 4294901760
    %v1665 = vsub.f32 %v1663, %v1664
    %v1666 = vand.u32 %v1665, 4294901760
    %1667 = vmatpush1.msra.mxu0 %v1666
    %v1668 = vand.u32 %v60, 4294901760
    %v1669 = vsub.f32 %v60, %v1668
    %v1670 = vand.u32 %v1669, 4294901760
    %v1671 = vsub.f32 %v1669, %v1670
    %v1672 = vand.u32 %v1671, 4294901760
    %1673 = vmatprep.subr.mxu0 %v1672
    %v1674 = vand.u32 %v59, 4294901760
    %v1675 = vsub.f32 %v59, %v1674
    %v1676 = vand.u32 %v1675, 4294901760
    %v1677 = vsub.f32 %v1675, %v1676
    %v1678 = vand.u32 %v1677, 4294901760
    %1679 = vmatpush1.msra.mxu0 %v1678
    %v1680 = vand.u32 %v62, 4294901760
    %v1681 = vsub.f32 %v62, %v1680
    %v1682 = vand.u32 %v1681, 4294901760
    %v1683 = vsub.f32 %v1681, %v1682
    %v1684 = vand.u32 %v1683, 4294901760
    %1685 = vmatprep.subr.mxu0 %v1684
    %v1686 = vand.u32 %v61, 4294901760
    %v1687 = vsub.f32 %v61, %v1686
    %v1688 = vand.u32 %v1687, 4294901760
    %v1689 = vsub.f32 %v1687, %v1688
    %v1690 = vand.u32 %v1689, 4294901760
    %1691 = vmatpush1.msra.mxu0 %v1690
    %v1692 = vand.u32 %v64, 4294901760
    %v1693 = vsub.f32 %v64, %v1692
    %v1694 = vand.u32 %v1693, 4294901760
    %v1695 = vsub.f32 %v1693, %v1694
    %v1696 = vand.u32 %v1695, 4294901760
    %1697 = vmatprep.subr.mxu0 %v1696
    %v1698 = vand.u32 %v63, 4294901760
    %v1699 = vsub.f32 %v63, %v1698
    %v1700 = vand.u32 %v1699, 4294901760
    %v1701 = vsub.f32 %v1699, %v1700
    %v1702 = vand.u32 %v1701, 4294901760
    %1703 = vmatpush1.msra.mxu0 %v1702
    %v1704 = vand.u32 %v66, 4294901760
    %v1705 = vsub.f32 %v66, %v1704
    %v1706 = vand.u32 %v1705, 4294901760
    %v1707 = vsub.f32 %v1705, %v1706
    %v1708 = vand.u32 %v1707, 4294901760
    %1709 = vmatprep.subr.mxu0 %v1708
    %v1710 = vand.u32 %v65, 4294901760
    %v1711 = vsub.f32 %v65, %v1710
    %v1712 = vand.u32 %v1711, 4294901760
    %v1713 = vsub.f32 %v1711, %v1712
    %v1714 = vand.u32 %v1713, 4294901760
    %1715 = vmatpush1.msra.mxu0 %v1714
    %v1716 = vand.u32 %v68, 4294901760
    %v1717 = vsub.f32 %v68, %v1716
    %v1718 = vand.u32 %v1717, 4294901760
    %v1719 = vsub.f32 %v1717, %v1718
    %v1720 = vand.u32 %v1719, 4294901760
    %1721 = vmatprep.subr.mxu0 %v1720
    %v1722 = vand.u32 %v67, 4294901760
    %v1723 = vsub.f32 %v67, %v1722
    %v1724 = vand.u32 %v1723, 4294901760
    %v1725 = vsub.f32 %v1723, %v1724
    %v1726 = vand.u32 %v1725, 4294901760
    %1727 = vmatpush1.msra.mxu0 %v1726
    %v1728 = vand.u32 %v70, 4294901760
    %v1729 = vsub.f32 %v70, %v1728
    %v1730 = vand.u32 %v1729, 4294901760
    %v1731 = vsub.f32 %v1729, %v1730
    %v1732 = vand.u32 %v1731, 4294901760
    %1733 = vmatprep.subr.mxu0 %v1732
    %v1734 = vand.u32 %v69, 4294901760
    %v1735 = vsub.f32 %v69, %v1734
    %v1736 = vand.u32 %v1735, 4294901760
    %v1737 = vsub.f32 %v1735, %v1736
    %v1738 = vand.u32 %v1737, 4294901760
    %1739 = vmatpush1.msra.mxu0 %v1738
    %v1740 = vand.u32 %v72, 4294901760
    %v1741 = vsub.f32 %v72, %v1740
    %v1742 = vand.u32 %v1741, 4294901760
    %v1743 = vsub.f32 %v1741, %v1742
    %v1744 = vand.u32 %v1743, 4294901760
    %1745 = vmatprep.subr.mxu0 %v1744
    %v1746 = vand.u32 %v71, 4294901760
    %v1747 = vsub.f32 %v71, %v1746
    %v1748 = vand.u32 %v1747, 4294901760
    %v1749 = vsub.f32 %v1747, %v1748
    %v1750 = vand.u32 %v1749, 4294901760
    %1751 = vmatpush1.msra.mxu0 %v1750
    %v1752 = vand.u32 %v74, 4294901760
    %v1753 = vsub.f32 %v74, %v1752
    %v1754 = vand.u32 %v1753, 4294901760
    %v1755 = vsub.f32 %v1753, %v1754
    %v1756 = vand.u32 %v1755, 4294901760
    %1757 = vmatprep.subr.mxu0 %v1756
    %v1758 = vand.u32 %v73, 4294901760
    %v1759 = vsub.f32 %v73, %v1758
    %v1760 = vand.u32 %v1759, 4294901760
    %v1761 = vsub.f32 %v1759, %v1760
    %v1762 = vand.u32 %v1761, 4294901760
    %1763 = vmatpush1.msra.mxu0 %v1762
    %v1764 = vand.u32 %v76, 4294901760
    %v1765 = vsub.f32 %v76, %v1764
    %v1766 = vand.u32 %v1765, 4294901760
    %v1767 = vsub.f32 %v1765, %v1766
    %v1768 = vand.u32 %v1767, 4294901760
    %1769 = vmatprep.subr.mxu0 %v1768
    %v1770 = vand.u32 %v75, 4294901760
    %v1771 = vsub.f32 %v75, %v1770
    %v1772 = vand.u32 %v1771, 4294901760
    %v1773 = vsub.f32 %v1771, %v1772
    %v1774 = vand.u32 %v1773, 4294901760
    %1775 = vmatpush1.msra.mxu0 %v1774
    %v1776 = vand.u32 %v78, 4294901760
    %v1777 = vsub.f32 %v78, %v1776
    %v1778 = vand.u32 %v1777, 4294901760
    %v1779 = vsub.f32 %v1777, %v1778
    %v1780 = vand.u32 %v1779, 4294901760
    %1781 = vmatprep.subr.mxu0 %v1780
    %v1782 = vand.u32 %v77, 4294901760
    %v1783 = vsub.f32 %v77, %v1782
    %v1784 = vand.u32 %v1783, 4294901760
    %v1785 = vsub.f32 %v1783, %v1784
    %v1786 = vand.u32 %v1785, 4294901760
    %1787 = vmatpush1.msra.mxu0 %v1786
    %v1788 = vand.u32 %v80, 4294901760
    %v1789 = vsub.f32 %v80, %v1788
    %v1790 = vand.u32 %v1789, 4294901760
    %v1791 = vsub.f32 %v1789, %v1790
    %v1792 = vand.u32 %v1791, 4294901760
    %1793 = vmatprep.subr.mxu0 %v1792
    %v1794 = vand.u32 %v79, 4294901760
    %v1795 = vsub.f32 %v79, %v1794
    %v1796 = vand.u32 %v1795, 4294901760
    %v1797 = vsub.f32 %v1795, %v1796
    %v1798 = vand.u32 %v1797, 4294901760
    %1799 = vmatpush1.msra.mxu0 %v1798
    %v1800 = vand.u32 %v82, 4294901760
    %v1801 = vsub.f32 %v82, %v1800
    %v1802 = vand.u32 %v1801, 4294901760
    %v1803 = vsub.f32 %v1801, %v1802
    %v1804 = vand.u32 %v1803, 4294901760
    %1805 = vmatprep.subr.mxu0 %v1804
    %v1806 = vand.u32 %v81, 4294901760
    %v1807 = vsub.f32 %v81, %v1806
    %v1808 = vand.u32 %v1807, 4294901760
    %v1809 = vsub.f32 %v1807, %v1808
    %v1810 = vand.u32 %v1809, 4294901760
    %1811 = vmatpush1.msra.mxu0 %v1810
    %v1812 = vand.u32 %v84, 4294901760
    %v1813 = vsub.f32 %v84, %v1812
    %v1814 = vand.u32 %v1813, 4294901760
    %v1815 = vsub.f32 %v1813, %v1814
    %v1816 = vand.u32 %v1815, 4294901760
    %1817 = vmatprep.subr.mxu0 %v1816
    %v1818 = vand.u32 %v83, 4294901760
    %v1819 = vsub.f32 %v83, %v1818
    %v1820 = vand.u32 %v1819, 4294901760
    %v1821 = vsub.f32 %v1819, %v1820
    %v1822 = vand.u32 %v1821, 4294901760
    %1823 = vmatpush1.msra.mxu0 %v1822
    %v1824 = vand.u32 %v86, 4294901760
    %v1825 = vsub.f32 %v86, %v1824
    %v1826 = vand.u32 %v1825, 4294901760
    %v1827 = vsub.f32 %v1825, %v1826
    %v1828 = vand.u32 %v1827, 4294901760
    %1829 = vmatprep.subr.mxu0 %v1828
    %v1830 = vand.u32 %v85, 4294901760
    %v1831 = vsub.f32 %v85, %v1830
    %v1832 = vand.u32 %v1831, 4294901760
    %v1833 = vsub.f32 %v1831, %v1832
    %v1834 = vand.u32 %v1833, 4294901760
    %1835 = vmatpush1.msra.mxu0 %v1834
    %v1836 = vand.u32 %v88, 4294901760
    %v1837 = vsub.f32 %v88, %v1836
    %v1838 = vand.u32 %v1837, 4294901760
    %v1839 = vsub.f32 %v1837, %v1838
    %v1840 = vand.u32 %v1839, 4294901760
    %1841 = vmatprep.subr.mxu0 %v1840
    %v1842 = vand.u32 %v87, 4294901760
    %v1843 = vsub.f32 %v87, %v1842
    %v1844 = vand.u32 %v1843, 4294901760
    %v1845 = vsub.f32 %v1843, %v1844
    %v1846 = vand.u32 %v1845, 4294901760
    %1847 = vmatpush1.msra.mxu0 %v1846
    %v1848 = vand.u32 %v90, 4294901760
    %v1849 = vsub.f32 %v90, %v1848
    %v1850 = vand.u32 %v1849, 4294901760
    %v1851 = vsub.f32 %v1849, %v1850
    %v1852 = vand.u32 %v1851, 4294901760
    %1853 = vmatprep.subr.mxu0 %v1852
    %v1854 = vand.u32 %v89, 4294901760
    %v1855 = vsub.f32 %v89, %v1854
    %v1856 = vand.u32 %v1855, 4294901760
    %v1857 = vsub.f32 %v1855, %v1856
    %v1858 = vand.u32 %v1857, 4294901760
    %1859 = vmatpush1.msra.mxu0 %v1858
    %v1860 = vand.u32 %v92, 4294901760
    %v1861 = vsub.f32 %v92, %v1860
    %v1862 = vand.u32 %v1861, 4294901760
    %v1863 = vsub.f32 %v1861, %v1862
    %v1864 = vand.u32 %v1863, 4294901760
    %1865 = vmatprep.subr.mxu0 %v1864
    %v1866 = vand.u32 %v91, 4294901760
    %v1867 = vsub.f32 %v91, %v1866
    %v1868 = vand.u32 %v1867, 4294901760
    %v1869 = vsub.f32 %v1867, %v1868
    %v1870 = vand.u32 %v1869, 4294901760
    %1871 = vmatpush1.msra.mxu0 %v1870
    %v1872 = vand.u32 %v94, 4294901760
    %v1873 = vsub.f32 %v94, %v1872
    %v1874 = vand.u32 %v1873, 4294901760
    %v1875 = vsub.f32 %v1873, %v1874
    %v1876 = vand.u32 %v1875, 4294901760
    %1877 = vmatprep.subr.mxu0 %v1876
    %v1878 = vand.u32 %v93, 4294901760
    %v1879 = vsub.f32 %v93, %v1878
    %v1880 = vand.u32 %v1879, 4294901760
    %v1881 = vsub.f32 %v1879, %v1880
    %v1882 = vand.u32 %v1881, 4294901760
    %1883 = vmatpush1.msra.mxu0 %v1882
    %v1884 = vand.u32 %v96, 4294901760
    %v1885 = vsub.f32 %v96, %v1884
    %v1886 = vand.u32 %v1885, 4294901760
    %v1887 = vsub.f32 %v1885, %v1886
    %v1888 = vand.u32 %v1887, 4294901760
    %1889 = vmatprep.subr.mxu0 %v1888
    %v1890 = vand.u32 %v95, 4294901760
    %v1891 = vsub.f32 %v95, %v1890
    %v1892 = vand.u32 %v1891, 4294901760
    %v1893 = vsub.f32 %v1891, %v1892
    %v1894 = vand.u32 %v1893, 4294901760
    %1895 = vmatpush1.msra.mxu0 %v1894
    %v1896 = vand.u32 %v98, 4294901760
    %v1897 = vsub.f32 %v98, %v1896
    %v1898 = vand.u32 %v1897, 4294901760
    %v1899 = vsub.f32 %v1897, %v1898
    %v1900 = vand.u32 %v1899, 4294901760
    %1901 = vmatprep.subr.mxu0 %v1900
    %v1902 = vand.u32 %v97, 4294901760
    %v1903 = vsub.f32 %v97, %v1902
    %v1904 = vand.u32 %v1903, 4294901760
    %v1905 = vsub.f32 %v1903, %v1904
    %v1906 = vand.u32 %v1905, 4294901760
    %1907 = vmatpush1.msra.mxu0 %v1906
    %v1908 = vand.u32 %v100, 4294901760
    %v1909 = vsub.f32 %v100, %v1908
    %v1910 = vand.u32 %v1909, 4294901760
    %v1911 = vsub.f32 %v1909, %v1910
    %v1912 = vand.u32 %v1911, 4294901760
    %1913 = vmatprep.subr.mxu0 %v1912
    %v1914 = vand.u32 %v99, 4294901760
    %v1915 = vsub.f32 %v99, %v1914
    %v1916 = vand.u32 %v1915, 4294901760
    %v1917 = vsub.f32 %v1915, %v1916
    %v1918 = vand.u32 %v1917, 4294901760
    %1919 = vmatpush1.msra.mxu0 %v1918
    %v1920 = vand.u32 %v102, 4294901760
    %v1921 = vsub.f32 %v102, %v1920
    %v1922 = vand.u32 %v1921, 4294901760
    %v1923 = vsub.f32 %v1921, %v1922
    %v1924 = vand.u32 %v1923, 4294901760
    %1925 = vmatprep.subr.mxu0 %v1924
    %v1926 = vand.u32 %v101, 4294901760
    %v1927 = vsub.f32 %v101, %v1926
    %v1928 = vand.u32 %v1927, 4294901760
    %v1929 = vsub.f32 %v1927, %v1928
    %v1930 = vand.u32 %v1929, 4294901760
    %1931 = vmatpush1.msra.mxu0 %v1930
    %v1932 = vand.u32 %v104, 4294901760
    %v1933 = vsub.f32 %v104, %v1932
    %v1934 = vand.u32 %v1933, 4294901760
    %v1935 = vsub.f32 %v1933, %v1934
    %v1936 = vand.u32 %v1935, 4294901760
    %1937 = vmatprep.subr.mxu0 %v1936
    %v1938 = vand.u32 %v103, 4294901760
    %v1939 = vsub.f32 %v103, %v1938
    %v1940 = vand.u32 %v1939, 4294901760
    %v1941 = vsub.f32 %v1939, %v1940
    %v1942 = vand.u32 %v1941, 4294901760
    %1943 = vmatpush1.msra.mxu0 %v1942
    %v1944 = vand.u32 %v106, 4294901760
    %v1945 = vsub.f32 %v106, %v1944
    %v1946 = vand.u32 %v1945, 4294901760
    %v1947 = vsub.f32 %v1945, %v1946
    %v1948 = vand.u32 %v1947, 4294901760
    %1949 = vmatprep.subr.mxu0 %v1948
    %v1950 = vand.u32 %v105, 4294901760
    %v1951 = vsub.f32 %v105, %v1950
    %v1952 = vand.u32 %v1951, 4294901760
    %v1953 = vsub.f32 %v1951, %v1952
    %v1954 = vand.u32 %v1953, 4294901760
    %1955 = vmatpush1.msra.mxu0 %v1954
    %v1956 = vand.u32 %v108, 4294901760
    %v1957 = vsub.f32 %v108, %v1956
    %v1958 = vand.u32 %v1957, 4294901760
    %v1959 = vsub.f32 %v1957, %v1958
    %v1960 = vand.u32 %v1959, 4294901760
    %1961 = vmatprep.subr.mxu0 %v1960
    %v1962 = vand.u32 %v107, 4294901760
    %v1963 = vsub.f32 %v107, %v1962
    %v1964 = vand.u32 %v1963, 4294901760
    %v1965 = vsub.f32 %v1963, %v1964
    %v1966 = vand.u32 %v1965, 4294901760
    %1967 = vmatpush1.msra.mxu0 %v1966
    %v1968 = vand.u32 %v110, 4294901760
    %v1969 = vsub.f32 %v110, %v1968
    %v1970 = vand.u32 %v1969, 4294901760
    %v1971 = vsub.f32 %v1969, %v1970
    %v1972 = vand.u32 %v1971, 4294901760
    %1973 = vmatprep.subr.mxu0 %v1972
    %v1974 = vand.u32 %v109, 4294901760
    %v1975 = vsub.f32 %v109, %v1974
    %v1976 = vand.u32 %v1975, 4294901760
    %v1977 = vsub.f32 %v1975, %v1976
    %v1978 = vand.u32 %v1977, 4294901760
    %1979 = vmatpush1.msra.mxu0 %v1978
    %v1980 = vand.u32 %v112, 4294901760
    %v1981 = vsub.f32 %v112, %v1980
    %v1982 = vand.u32 %v1981, 4294901760
    %v1983 = vsub.f32 %v1981, %v1982
    %v1984 = vand.u32 %v1983, 4294901760
    %1985 = vmatprep.subr.mxu0 %v1984
    %v1986 = vand.u32 %v111, 4294901760
    %v1987 = vsub.f32 %v111, %v1986
    %v1988 = vand.u32 %v1987, 4294901760
    %v1989 = vsub.f32 %v1987, %v1988
    %v1990 = vand.u32 %v1989, 4294901760
    %1991 = vmatpush1.msra.mxu0 %v1990
    %v1992 = vand.u32 %v114, 4294901760
    %v1993 = vsub.f32 %v114, %v1992
    %v1994 = vand.u32 %v1993, 4294901760
    %v1995 = vsub.f32 %v1993, %v1994
    %v1996 = vand.u32 %v1995, 4294901760
    %1997 = vmatprep.subr.mxu0 %v1996
    %v1998 = vand.u32 %v113, 4294901760
    %v1999 = vsub.f32 %v113, %v1998
    %v2000 = vand.u32 %v1999, 4294901760
    %v2001 = vsub.f32 %v1999, %v2000
    %v2002 = vand.u32 %v2001, 4294901760
    %2003 = vmatpush1.msra.mxu0 %v2002
    %v2004 = vand.u32 %v116, 4294901760
    %v2005 = vsub.f32 %v116, %v2004
    %v2006 = vand.u32 %v2005, 4294901760
    %v2007 = vsub.f32 %v2005, %v2006
    %v2008 = vand.u32 %v2007, 4294901760
    %2009 = vmatprep.subr.mxu0 %v2008
    %v2010 = vand.u32 %v115, 4294901760
    %v2011 = vsub.f32 %v115, %v2010
    %v2012 = vand.u32 %v2011, 4294901760
    %v2013 = vsub.f32 %v2011, %v2012
    %v2014 = vand.u32 %v2013, 4294901760
    %2015 = vmatpush1.msra.mxu0 %v2014
    %v2016 = vand.u32 %v1484, 4294901760
    %2017 = vmatprep.mubr.f32.mxu0 %v2016
    %v2018 = vand.u32 %v1483, 4294901760
    %2019 = vmatmul.mubr.f32.gmra.mrb[0].mxu0 %v2018
    %v2020 = vpop.f32.mrb[0].mxu0
    %v2021 = vadd.f32 %v1628, %v2020
    %v2022 = vpop.f32.mrb[0].mxu0
    %v2023 = vadd.f32 %v1630, %v2022
    %2024 = vdwg.mxu0
    %v2025 = vand.u32 %v54, 4294901760
    %v2026 = vsub.f32 %v54, %v2025
    %2027 = vmatprep.subr.mxu0 %v2026
    %v2028 = vand.u32 %v53, 4294901760
    %v2029 = vsub.f32 %v53, %v2028
    %2030 = vmatpush1.msra.mxu0 %v2029
    %v2031 = vand.u32 %v56, 4294901760
    %v2032 = vsub.f32 %v56, %v2031
    %2033 = vmatprep.subr.mxu0 %v2032
    %v2034 = vand.u32 %v55, 4294901760
    %v2035 = vsub.f32 %v55, %v2034
    %2036 = vmatpush1.msra.mxu0 %v2035
    %v2037 = vand.u32 %v58, 4294901760
    %v2038 = vsub.f32 %v58, %v2037
    %2039 = vmatprep.subr.mxu0 %v2038
    %v2040 = vand.u32 %v57, 4294901760
    %v2041 = vsub.f32 %v57, %v2040
    %2042 = vmatpush1.msra.mxu0 %v2041
    %v2043 = vand.u32 %v60, 4294901760
    %v2044 = vsub.f32 %v60, %v2043
    %2045 = vmatprep.subr.mxu0 %v2044
    %v2046 = vand.u32 %v59, 4294901760
    %v2047 = vsub.f32 %v59, %v2046
    %2048 = vmatpush1.msra.mxu0 %v2047
    %v2049 = vand.u32 %v62, 4294901760
    %v2050 = vsub.f32 %v62, %v2049
    %2051 = vmatprep.subr.mxu0 %v2050
    %v2052 = vand.u32 %v61, 4294901760
    %v2053 = vsub.f32 %v61, %v2052
    %2054 = vmatpush1.msra.mxu0 %v2053
    %v2055 = vand.u32 %v64, 4294901760
    %v2056 = vsub.f32 %v64, %v2055
    %2057 = vmatprep.subr.mxu0 %v2056
    %v2058 = vand.u32 %v63, 4294901760
    %v2059 = vsub.f32 %v63, %v2058
    %2060 = vmatpush1.msra.mxu0 %v2059
    %v2061 = vand.u32 %v66, 4294901760
    %v2062 = vsub.f32 %v66, %v2061
    %2063 = vmatprep.subr.mxu0 %v2062
    %v2064 = vand.u32 %v65, 4294901760
    %v2065 = vsub.f32 %v65, %v2064
    %2066 = vmatpush1.msra.mxu0 %v2065
    %v2067 = vand.u32 %v68, 4294901760
    %v2068 = vsub.f32 %v68, %v2067
    %2069 = vmatprep.subr.mxu0 %v2068
    %v2070 = vand.u32 %v67, 4294901760
    %v2071 = vsub.f32 %v67, %v2070
    %2072 = vmatpush1.msra.mxu0 %v2071
    %v2073 = vand.u32 %v70, 4294901760
    %v2074 = vsub.f32 %v70, %v2073
    %2075 = vmatprep.subr.mxu0 %v2074
    %v2076 = vand.u32 %v69, 4294901760
    %v2077 = vsub.f32 %v69, %v2076
    %2078 = vmatpush1.msra.mxu0 %v2077
    %v2079 = vand.u32 %v72, 4294901760
    %v2080 = vsub.f32 %v72, %v2079
    %2081 = vmatprep.subr.mxu0 %v2080
    %v2082 = vand.u32 %v71, 4294901760
    %v2083 = vsub.f32 %v71, %v2082
    %2084 = vmatpush1.msra.mxu0 %v2083
    %v2085 = vand.u32 %v74, 4294901760
    %v2086 = vsub.f32 %v74, %v2085
    %2087 = vmatprep.subr.mxu0 %v2086
    %v2088 = vand.u32 %v73, 4294901760
    %v2089 = vsub.f32 %v73, %v2088
    %2090 = vmatpush1.msra.mxu0 %v2089
    %v2091 = vand.u32 %v76, 4294901760
    %v2092 = vsub.f32 %v76, %v2091
    %2093 = vmatprep.subr.mxu0 %v2092
    %v2094 = vand.u32 %v75, 4294901760
    %v2095 = vsub.f32 %v75, %v2094
    %2096 = vmatpush1.msra.mxu0 %v2095
    %v2097 = vand.u32 %v78, 4294901760
    %v2098 = vsub.f32 %v78, %v2097
    %2099 = vmatprep.subr.mxu0 %v2098
    %v2100 = vand.u32 %v77, 4294901760
    %v2101 = vsub.f32 %v77, %v2100
    %2102 = vmatpush1.msra.mxu0 %v2101
    %v2103 = vand.u32 %v80, 4294901760
    %v2104 = vsub.f32 %v80, %v2103
    %2105 = vmatprep.subr.mxu0 %v2104
    %v2106 = vand.u32 %v79, 4294901760
    %v2107 = vsub.f32 %v79, %v2106
    %2108 = vmatpush1.msra.mxu0 %v2107
    %v2109 = vand.u32 %v82, 4294901760
    %v2110 = vsub.f32 %v82, %v2109
    %2111 = vmatprep.subr.mxu0 %v2110
    %v2112 = vand.u32 %v81, 4294901760
    %v2113 = vsub.f32 %v81, %v2112
    %2114 = vmatpush1.msra.mxu0 %v2113
    %v2115 = vand.u32 %v84, 4294901760
    %v2116 = vsub.f32 %v84, %v2115
    %2117 = vmatprep.subr.mxu0 %v2116
    %v2118 = vand.u32 %v83, 4294901760
    %v2119 = vsub.f32 %v83, %v2118
    %2120 = vmatpush1.msra.mxu0 %v2119
    %v2121 = vand.u32 %v86, 4294901760
    %v2122 = vsub.f32 %v86, %v2121
    %2123 = vmatprep.subr.mxu0 %v2122
    %v2124 = vand.u32 %v85, 4294901760
    %v2125 = vsub.f32 %v85, %v2124
    %2126 = vmatpush1.msra.mxu0 %v2125
    %v2127 = vand.u32 %v88, 4294901760
    %v2128 = vsub.f32 %v88, %v2127
    %2129 = vmatprep.subr.mxu0 %v2128
    %v2130 = vand.u32 %v87, 4294901760
    %v2131 = vsub.f32 %v87, %v2130
    %2132 = vmatpush1.msra.mxu0 %v2131
    %v2133 = vand.u32 %v90, 4294901760
    %v2134 = vsub.f32 %v90, %v2133
    %2135 = vmatprep.subr.mxu0 %v2134
    %v2136 = vand.u32 %v89, 4294901760
    %v2137 = vsub.f32 %v89, %v2136
    %2138 = vmatpush1.msra.mxu0 %v2137
    %v2139 = vand.u32 %v92, 4294901760
    %v2140 = vsub.f32 %v92, %v2139
    %2141 = vmatprep.subr.mxu0 %v2140
    %v2142 = vand.u32 %v91, 4294901760
    %v2143 = vsub.f32 %v91, %v2142
    %2144 = vmatpush1.msra.mxu0 %v2143
    %v2145 = vand.u32 %v94, 4294901760
    %v2146 = vsub.f32 %v94, %v2145
    %2147 = vmatprep.subr.mxu0 %v2146
    %v2148 = vand.u32 %v93, 4294901760
    %v2149 = vsub.f32 %v93, %v2148
    %2150 = vmatpush1.msra.mxu0 %v2149
    %v2151 = vand.u32 %v96, 4294901760
    %v2152 = vsub.f32 %v96, %v2151
    %2153 = vmatprep.subr.mxu0 %v2152
    %v2154 = vand.u32 %v95, 4294901760
    %v2155 = vsub.f32 %v95, %v2154
    %2156 = vmatpush1.msra.mxu0 %v2155
    %v2157 = vand.u32 %v98, 4294901760
    %v2158 = vsub.f32 %v98, %v2157
    %2159 = vmatprep.subr.mxu0 %v2158
    %v2160 = vand.u32 %v97, 4294901760
    %v2161 = vsub.f32 %v97, %v2160
    %2162 = vmatpush1.msra.mxu0 %v2161
    %v2163 = vand.u32 %v100, 4294901760
    %v2164 = vsub.f32 %v100, %v2163
    %2165 = vmatprep.subr.mxu0 %v2164
    %v2166 = vand.u32 %v99, 4294901760
    %v2167 = vsub.f32 %v99, %v2166
    %2168 = vmatpush1.msra.mxu0 %v2167
    %v2169 = vand.u32 %v102, 4294901760
    %v2170 = vsub.f32 %v102, %v2169
    %2171 = vmatprep.subr.mxu0 %v2170
    %v2172 = vand.u32 %v101, 4294901760
    %v2173 = vsub.f32 %v101, %v2172
    %2174 = vmatpush1.msra.mxu0 %v2173
    %v2175 = vand.u32 %v104, 4294901760
    %v2176 = vsub.f32 %v104, %v2175
    %2177 = vmatprep.subr.mxu0 %v2176
    %v2178 = vand.u32 %v103, 4294901760
    %v2179 = vsub.f32 %v103, %v2178
    %2180 = vmatpush1.msra.mxu0 %v2179
    %v2181 = vand.u32 %v106, 4294901760
    %v2182 = vsub.f32 %v106, %v2181
    %2183 = vmatprep.subr.mxu0 %v2182
    %v2184 = vand.u32 %v105, 4294901760
    %v2185 = vsub.f32 %v105, %v2184
    %2186 = vmatpush1.msra.mxu0 %v2185
    %v2187 = vand.u32 %v108, 4294901760
    %v2188 = vsub.f32 %v108, %v2187
    %2189 = vmatprep.subr.mxu0 %v2188
    %v2190 = vand.u32 %v107, 4294901760
    %v2191 = vsub.f32 %v107, %v2190
    %2192 = vmatpush1.msra.mxu0 %v2191
    %v2193 = vand.u32 %v110, 4294901760
    %v2194 = vsub.f32 %v110, %v2193
    %2195 = vmatprep.subr.mxu0 %v2194
    %v2196 = vand.u32 %v109, 4294901760
    %v2197 = vsub.f32 %v109, %v2196
    %2198 = vmatpush1.msra.mxu0 %v2197
    %v2199 = vand.u32 %v112, 4294901760
    %v2200 = vsub.f32 %v112, %v2199
    %2201 = vmatprep.subr.mxu0 %v2200
    %v2202 = vand.u32 %v111, 4294901760
    %v2203 = vsub.f32 %v111, %v2202
    %2204 = vmatpush1.msra.mxu0 %v2203
    %v2205 = vand.u32 %v114, 4294901760
    %v2206 = vsub.f32 %v114, %v2205
    %2207 = vmatprep.subr.mxu0 %v2206
    %v2208 = vand.u32 %v113, 4294901760
    %v2209 = vsub.f32 %v113, %v2208
    %2210 = vmatpush1.msra.mxu0 %v2209
    %v2211 = vand.u32 %v116, 4294901760
    %v2212 = vsub.f32 %v116, %v2211
    %2213 = vmatprep.subr.mxu0 %v2212
    %v2214 = vand.u32 %v115, 4294901760
    %v2215 = vsub.f32 %v115, %v2214
    %2216 = vmatpush1.msra.mxu0 %v2215
    %v2217 = vand.u32 %v1484, 4294901760
    %v2218 = vsub.f32 %v1484, %v2217
    %2219 = vmatprep.mubr.f32.mxu0 %v2218
    %v2220 = vand.u32 %v1483, 4294901760
    %v2221 = vsub.f32 %v1483, %v2220
    %2222 = vmatmul.mubr.f32.gmra.mrb[0].mxu0 %v2221
    %v2223 = vpop.f32.mrb[0].mxu0
    %v2224 = vadd.f32 %v2021, %v2223
    %v2225 = vpop.f32.mrb[0].mxu0
    %v2226 = vadd.f32 %v2023, %v2225
    %2227 = vdwg.mxu0
    %v2228 = vand.u32 %v54, 4294901760
    %2229 = vmatprep.subr.mxu0 %v2228
    %v2230 = vand.u32 %v53, 4294901760
    %2231 = vmatpush1.msra.mxu0 %v2230
    %v2232 = vand.u32 %v56, 4294901760
    %2233 = vmatprep.subr.mxu0 %v2232
    %v2234 = vand.u32 %v55, 4294901760
    %2235 = vmatpush1.msra.mxu0 %v2234
    %v2236 = vand.u32 %v58, 4294901760
    %2237 = vmatprep.subr.mxu0 %v2236
    %v2238 = vand.u32 %v57, 4294901760
    %2239 = vmatpush1.msra.mxu0 %v2238
    %v2240 = vand.u32 %v60, 4294901760
    %2241 = vmatprep.subr.mxu0 %v2240
    %v2242 = vand.u32 %v59, 4294901760
    %2243 = vmatpush1.msra.mxu0 %v2242
    %v2244 = vand.u32 %v62, 4294901760
    %2245 = vmatprep.subr.mxu0 %v2244
    %v2246 = vand.u32 %v61, 4294901760
    %2247 = vmatpush1.msra.mxu0 %v2246
    %v2248 = vand.u32 %v64, 4294901760
    %2249 = vmatprep.subr.mxu0 %v2248
    %v2250 = vand.u32 %v63, 4294901760
    %2251 = vmatpush1.msra.mxu0 %v2250
    %v2252 = vand.u32 %v66, 4294901760
    %2253 = vmatprep.subr.mxu0 %v2252
    %v2254 = vand.u32 %v65, 4294901760
    %2255 = vmatpush1.msra.mxu0 %v2254
    %v2256 = vand.u32 %v68, 4294901760
    %2257 = vmatprep.subr.mxu0 %v2256
    %v2258 = vand.u32 %v67, 4294901760
    %2259 = vmatpush1.msra.mxu0 %v2258
    %v2260 = vand.u32 %v70, 4294901760
    %2261 = vmatprep.subr.mxu0 %v2260
    %v2262 = vand.u32 %v69, 4294901760
    %2263 = vmatpush1.msra.mxu0 %v2262
    %v2264 = vand.u32 %v72, 4294901760
    %2265 = vmatprep.subr.mxu0 %v2264
    %v2266 = vand.u32 %v71, 4294901760
    %2267 = vmatpush1.msra.mxu0 %v2266
    %v2268 = vand.u32 %v74, 4294901760
    %2269 = vmatprep.subr.mxu0 %v2268
    %v2270 = vand.u32 %v73, 4294901760
    %2271 = vmatpush1.msra.mxu0 %v2270
    %v2272 = vand.u32 %v76, 4294901760
    %2273 = vmatprep.subr.mxu0 %v2272
    %v2274 = vand.u32 %v75, 4294901760
    %2275 = vmatpush1.msra.mxu0 %v2274
    %v2276 = vand.u32 %v78, 4294901760
    %2277 = vmatprep.subr.mxu0 %v2276
    %v2278 = vand.u32 %v77, 4294901760
    %2279 = vmatpush1.msra.mxu0 %v2278
    %v2280 = vand.u32 %v80, 4294901760
    %2281 = vmatprep.subr.mxu0 %v2280
    %v2282 = vand.u32 %v79, 4294901760
    %2283 = vmatpush1.msra.mxu0 %v2282
    %v2284 = vand.u32 %v82, 4294901760
    %2285 = vmatprep.subr.mxu0 %v2284
    %v2286 = vand.u32 %v81, 4294901760
    %2287 = vmatpush1.msra.mxu0 %v2286
    %v2288 = vand.u32 %v84, 4294901760
    %2289 = vmatprep.subr.mxu0 %v2288
    %v2290 = vand.u32 %v83, 4294901760
    %2291 = vmatpush1.msra.mxu0 %v2290
    %v2292 = vand.u32 %v86, 4294901760
    %2293 = vmatprep.subr.mxu0 %v2292
    %v2294 = vand.u32 %v85, 4294901760
    %2295 = vmatpush1.msra.mxu0 %v2294
    %v2296 = vand.u32 %v88, 4294901760
    %2297 = vmatprep.subr.mxu0 %v2296
    %v2298 = vand.u32 %v87, 4294901760
    %2299 = vmatpush1.msra.mxu0 %v2298
    %v2300 = vand.u32 %v90, 4294901760
    %2301 = vmatprep.subr.mxu0 %v2300
    %v2302 = vand.u32 %v89, 4294901760
    %2303 = vmatpush1.msra.mxu0 %v2302
    %v2304 = vand.u32 %v92, 4294901760
    %2305 = vmatprep.subr.mxu0 %v2304
    %v2306 = vand.u32 %v91, 4294901760
    %2307 = vmatpush1.msra.mxu0 %v2306
    %v2308 = vand.u32 %v94, 4294901760
    %2309 = vmatprep.subr.mxu0 %v2308
    %v2310 = vand.u32 %v93, 4294901760
    %2311 = vmatpush1.msra.mxu0 %v2310
    %v2312 = vand.u32 %v96, 4294901760
    %2313 = vmatprep.subr.mxu0 %v2312
    %v2314 = vand.u32 %v95, 4294901760
    %2315 = vmatpush1.msra.mxu0 %v2314
    %v2316 = vand.u32 %v98, 4294901760
    %2317 = vmatprep.subr.mxu0 %v2316
    %v2318 = vand.u32 %v97, 4294901760
    %2319 = vmatpush1.msra.mxu0 %v2318
    %v2320 = vand.u32 %v100, 4294901760
    %2321 = vmatprep.subr.mxu0 %v2320
    %v2322 = vand.u32 %v99, 4294901760
    %2323 = vmatpush1.msra.mxu0 %v2322
    %v2324 = vand.u32 %v102, 4294901760
    %2325 = vmatprep.subr.mxu0 %v2324
    %v2326 = vand.u32 %v101, 4294901760
    %2327 = vmatpush1.msra.mxu0 %v2326
    %v2328 = vand.u32 %v104, 4294901760
    %2329 = vmatprep.subr.mxu0 %v2328
    %v2330 = vand.u32 %v103, 4294901760
    %2331 = vmatpush1.msra.mxu0 %v2330
    %v2332 = vand.u32 %v106, 4294901760
    %2333 = vmatprep.subr.mxu0 %v2332
    %v2334 = vand.u32 %v105, 4294901760
    %2335 = vmatpush1.msra.mxu0 %v2334
    %v2336 = vand.u32 %v108, 4294901760
    %2337 = vmatprep.subr.mxu0 %v2336
    %v2338 = vand.u32 %v107, 4294901760
    %2339 = vmatpush1.msra.mxu0 %v2338
    %v2340 = vand.u32 %v110, 4294901760
    %2341 = vmatprep.subr.mxu0 %v2340
    %v2342 = vand.u32 %v109, 4294901760
    %2343 = vmatpush1.msra.mxu0 %v2342
    %v2344 = vand.u32 %v112, 4294901760
    %2345 = vmatprep.subr.mxu0 %v2344
    %v2346 = vand.u32 %v111, 4294901760
    %2347 = vmatpush1.msra.mxu0 %v2346
    %v2348 = vand.u32 %v114, 4294901760
    %2349 = vmatprep.subr.mxu0 %v2348
    %v2350 = vand.u32 %v113, 4294901760
    %2351 = vmatpush1.msra.mxu0 %v2350
    %v2352 = vand.u32 %v116, 4294901760
    %2353 = vmatprep.subr.mxu0 %v2352
    %v2354 = vand.u32 %v115, 4294901760
    %2355 = vmatpush1.msra.mxu0 %v2354
    %v2356 = vand.u32 %v1484, 4294901760
    %v2357 = vsub.f32 %v1484, %v2356
    %v2358 = vand.u32 %v2357, 4294901760
    %2359 = vmatprep.mubr.f32.mxu0 %v2358
    %v2360 = vand.u32 %v1483, 4294901760
    %v2361 = vsub.f32 %v1483, %v2360
    %v2362 = vand.u32 %v2361, 4294901760
    %2363 = vmatmul.mubr.f32.gmra.mrb[0].mxu0 %v2362
    %v2364 = vpop.f32.mrb[0].mxu0
    %v2365 = vadd.f32 %v2224, %v2364
    %v2366 = vpop.f32.mrb[0].mxu0
    %v2367 = vadd.f32 %v2226, %v2366
    %2368 = vdwg.mxu0
    %v2369 = vand.u32 %v54, 4294901760
    %v2370 = vsub.f32 %v54, %v2369
    %v2371 = vand.u32 %v2370, 4294901760
    %2372 = vmatprep.subr.mxu0 %v2371
    %v2373 = vand.u32 %v53, 4294901760
    %v2374 = vsub.f32 %v53, %v2373
    %v2375 = vand.u32 %v2374, 4294901760
    %2376 = vmatpush1.msra.mxu0 %v2375
    %v2377 = vand.u32 %v56, 4294901760
    %v2378 = vsub.f32 %v56, %v2377
    %v2379 = vand.u32 %v2378, 4294901760
    %2380 = vmatprep.subr.mxu0 %v2379
    %v2381 = vand.u32 %v55, 4294901760
    %v2382 = vsub.f32 %v55, %v2381
    %v2383 = vand.u32 %v2382, 4294901760
    %2384 = vmatpush1.msra.mxu0 %v2383
    %v2385 = vand.u32 %v58, 4294901760
    %v2386 = vsub.f32 %v58, %v2385
    %v2387 = vand.u32 %v2386, 4294901760
    %2388 = vmatprep.subr.mxu0 %v2387
    %v2389 = vand.u32 %v57, 4294901760
    %v2390 = vsub.f32 %v57, %v2389
    %v2391 = vand.u32 %v2390, 4294901760
    %2392 = vmatpush1.msra.mxu0 %v2391
    %v2393 = vand.u32 %v60, 4294901760
    %v2394 = vsub.f32 %v60, %v2393
    %v2395 = vand.u32 %v2394, 4294901760
    %2396 = vmatprep.subr.mxu0 %v2395
    %v2397 = vand.u32 %v59, 4294901760
    %v2398 = vsub.f32 %v59, %v2397
    %v2399 = vand.u32 %v2398, 4294901760
    %2400 = vmatpush1.msra.mxu0 %v2399
    %v2401 = vand.u32 %v62, 4294901760
    %v2402 = vsub.f32 %v62, %v2401
    %v2403 = vand.u32 %v2402, 4294901760
    %2404 = vmatprep.subr.mxu0 %v2403
    %v2405 = vand.u32 %v61, 4294901760
    %v2406 = vsub.f32 %v61, %v2405
    %v2407 = vand.u32 %v2406, 4294901760
    %2408 = vmatpush1.msra.mxu0 %v2407
    %v2409 = vand.u32 %v64, 4294901760
    %v2410 = vsub.f32 %v64, %v2409
    %v2411 = vand.u32 %v2410, 4294901760
    %2412 = vmatprep.subr.mxu0 %v2411
    %v2413 = vand.u32 %v63, 4294901760
    %v2414 = vsub.f32 %v63, %v2413
    %v2415 = vand.u32 %v2414, 4294901760
    %2416 = vmatpush1.msra.mxu0 %v2415
    %v2417 = vand.u32 %v66, 4294901760
    %v2418 = vsub.f32 %v66, %v2417
    %v2419 = vand.u32 %v2418, 4294901760
    %2420 = vmatprep.subr.mxu0 %v2419
    %v2421 = vand.u32 %v65, 4294901760
    %v2422 = vsub.f32 %v65, %v2421
    %v2423 = vand.u32 %v2422, 4294901760
    %2424 = vmatpush1.msra.mxu0 %v2423
    %v2425 = vand.u32 %v68, 4294901760
    %v2426 = vsub.f32 %v68, %v2425
    %v2427 = vand.u32 %v2426, 4294901760
    %2428 = vmatprep.subr.mxu0 %v2427
    %v2429 = vand.u32 %v67, 4294901760
    %v2430 = vsub.f32 %v67, %v2429
    %v2431 = vand.u32 %v2430, 4294901760
    %2432 = vmatpush1.msra.mxu0 %v2431
    %v2433 = vand.u32 %v70, 4294901760
    %v2434 = vsub.f32 %v70, %v2433
    %v2435 = vand.u32 %v2434, 4294901760
    %2436 = vmatprep.subr.mxu0 %v2435
    %v2437 = vand.u32 %v69, 4294901760
    %v2438 = vsub.f32 %v69, %v2437
    %v2439 = vand.u32 %v2438, 4294901760
    %2440 = vmatpush1.msra.mxu0 %v2439
    %v2441 = vand.u32 %v72, 4294901760
    %v2442 = vsub.f32 %v72, %v2441
    %v2443 = vand.u32 %v2442, 4294901760
    %2444 = vmatprep.subr.mxu0 %v2443
    %v2445 = vand.u32 %v71, 4294901760
    %v2446 = vsub.f32 %v71, %v2445
    %v2447 = vand.u32 %v2446, 4294901760
    %2448 = vmatpush1.msra.mxu0 %v2447
    %v2449 = vand.u32 %v74, 4294901760
    %v2450 = vsub.f32 %v74, %v2449
    %v2451 = vand.u32 %v2450, 4294901760
    %2452 = vmatprep.subr.mxu0 %v2451
    %v2453 = vand.u32 %v73, 4294901760
    %v2454 = vsub.f32 %v73, %v2453
    %v2455 = vand.u32 %v2454, 4294901760
    %2456 = vmatpush1.msra.mxu0 %v2455
    %v2457 = vand.u32 %v76, 4294901760
    %v2458 = vsub.f32 %v76, %v2457
    %v2459 = vand.u32 %v2458, 4294901760
    %2460 = vmatprep.subr.mxu0 %v2459
    %v2461 = vand.u32 %v75, 4294901760
    %v2462 = vsub.f32 %v75, %v2461
    %v2463 = vand.u32 %v2462, 4294901760
    %2464 = vmatpush1.msra.mxu0 %v2463
    %v2465 = vand.u32 %v78, 4294901760
    %v2466 = vsub.f32 %v78, %v2465
    %v2467 = vand.u32 %v2466, 4294901760
    %2468 = vmatprep.subr.mxu0 %v2467
    %v2469 = vand.u32 %v77, 4294901760
    %v2470 = vsub.f32 %v77, %v2469
    %v2471 = vand.u32 %v2470, 4294901760
    %2472 = vmatpush1.msra.mxu0 %v2471
    %v2473 = vand.u32 %v80, 4294901760
    %v2474 = vsub.f32 %v80, %v2473
    %v2475 = vand.u32 %v2474, 4294901760
    %2476 = vmatprep.subr.mxu0 %v2475
    %v2477 = vand.u32 %v79, 4294901760
    %v2478 = vsub.f32 %v79, %v2477
    %v2479 = vand.u32 %v2478, 4294901760
    %2480 = vmatpush1.msra.mxu0 %v2479
    %v2481 = vand.u32 %v82, 4294901760
    %v2482 = vsub.f32 %v82, %v2481
    %v2483 = vand.u32 %v2482, 4294901760
    %2484 = vmatprep.subr.mxu0 %v2483
    %v2485 = vand.u32 %v81, 4294901760
    %v2486 = vsub.f32 %v81, %v2485
    %v2487 = vand.u32 %v2486, 4294901760
    %2488 = vmatpush1.msra.mxu0 %v2487
    %v2489 = vand.u32 %v84, 4294901760
    %v2490 = vsub.f32 %v84, %v2489
    %v2491 = vand.u32 %v2490, 4294901760
    %2492 = vmatprep.subr.mxu0 %v2491
    %v2493 = vand.u32 %v83, 4294901760
    %v2494 = vsub.f32 %v83, %v2493
    %v2495 = vand.u32 %v2494, 4294901760
    %2496 = vmatpush1.msra.mxu0 %v2495
    %v2497 = vand.u32 %v86, 4294901760
    %v2498 = vsub.f32 %v86, %v2497
    %v2499 = vand.u32 %v2498, 4294901760
    %2500 = vmatprep.subr.mxu0 %v2499
    %v2501 = vand.u32 %v85, 4294901760
    %v2502 = vsub.f32 %v85, %v2501
    %v2503 = vand.u32 %v2502, 4294901760
    %2504 = vmatpush1.msra.mxu0 %v2503
    %v2505 = vand.u32 %v88, 4294901760
    %v2506 = vsub.f32 %v88, %v2505
    %v2507 = vand.u32 %v2506, 4294901760
    %2508 = vmatprep.subr.mxu0 %v2507
    %v2509 = vand.u32 %v87, 4294901760
    %v2510 = vsub.f32 %v87, %v2509
    %v2511 = vand.u32 %v2510, 4294901760
    %2512 = vmatpush1.msra.mxu0 %v2511
    %v2513 = vand.u32 %v90, 4294901760
    %v2514 = vsub.f32 %v90, %v2513
    %v2515 = vand.u32 %v2514, 4294901760
    %2516 = vmatprep.subr.mxu0 %v2515
    %v2517 = vand.u32 %v89, 4294901760
    %v2518 = vsub.f32 %v89, %v2517
    %v2519 = vand.u32 %v2518, 4294901760
    %2520 = vmatpush1.msra.mxu0 %v2519
    %v2521 = vand.u32 %v92, 4294901760
    %v2522 = vsub.f32 %v92, %v2521
    %v2523 = vand.u32 %v2522, 4294901760
    %2524 = vmatprep.subr.mxu0 %v2523
    %v2525 = vand.u32 %v91, 4294901760
    %v2526 = vsub.f32 %v91, %v2525
    %v2527 = vand.u32 %v2526, 4294901760
    %2528 = vmatpush1.msra.mxu0 %v2527
    %v2529 = vand.u32 %v94, 4294901760
    %v2530 = vsub.f32 %v94, %v2529
    %v2531 = vand.u32 %v2530, 4294901760
    %2532 = vmatprep.subr.mxu0 %v2531
    %v2533 = vand.u32 %v93, 4294901760
    %v2534 = vsub.f32 %v93, %v2533
    %v2535 = vand.u32 %v2534, 4294901760
    %2536 = vmatpush1.msra.mxu0 %v2535
    %v2537 = vand.u32 %v96, 4294901760
    %v2538 = vsub.f32 %v96, %v2537
    %v2539 = vand.u32 %v2538, 4294901760
    %2540 = vmatprep.subr.mxu0 %v2539
    %v2541 = vand.u32 %v95, 4294901760
    %v2542 = vsub.f32 %v95, %v2541
    %v2543 = vand.u32 %v2542, 4294901760
    %2544 = vmatpush1.msra.mxu0 %v2543
    %v2545 = vand.u32 %v98, 4294901760
    %v2546 = vsub.f32 %v98, %v2545
    %v2547 = vand.u32 %v2546, 4294901760
    %2548 = vmatprep.subr.mxu0 %v2547
    %v2549 = vand.u32 %v97, 4294901760
    %v2550 = vsub.f32 %v97, %v2549
    %v2551 = vand.u32 %v2550, 4294901760
    %2552 = vmatpush1.msra.mxu0 %v2551
    %v2553 = vand.u32 %v100, 4294901760
    %v2554 = vsub.f32 %v100, %v2553
    %v2555 = vand.u32 %v2554, 4294901760
    %2556 = vmatprep.subr.mxu0 %v2555
    %v2557 = vand.u32 %v99, 4294901760
    %v2558 = vsub.f32 %v99, %v2557
    %v2559 = vand.u32 %v2558, 4294901760
    %2560 = vmatpush1.msra.mxu0 %v2559
    %v2561 = vand.u32 %v102, 4294901760
    %v2562 = vsub.f32 %v102, %v2561
    %v2563 = vand.u32 %v2562, 4294901760
    %2564 = vmatprep.subr.mxu0 %v2563
    %v2565 = vand.u32 %v101, 4294901760
    %v2566 = vsub.f32 %v101, %v2565
    %v2567 = vand.u32 %v2566, 4294901760
    %2568 = vmatpush1.msra.mxu0 %v2567
    %v2569 = vand.u32 %v104, 4294901760
    %v2570 = vsub.f32 %v104, %v2569
    %v2571 = vand.u32 %v2570, 4294901760
    %2572 = vmatprep.subr.mxu0 %v2571
    %v2573 = vand.u32 %v103, 4294901760
    %v2574 = vsub.f32 %v103, %v2573
    %v2575 = vand.u32 %v2574, 4294901760
    %2576 = vmatpush1.msra.mxu0 %v2575
    %v2577 = vand.u32 %v106, 4294901760
    %v2578 = vsub.f32 %v106, %v2577
    %v2579 = vand.u32 %v2578, 4294901760
    %2580 = vmatprep.subr.mxu0 %v2579
    %v2581 = vand.u32 %v105, 4294901760
    %v2582 = vsub.f32 %v105, %v2581
    %v2583 = vand.u32 %v2582, 4294901760
    %2584 = vmatpush1.msra.mxu0 %v2583
    %v2585 = vand.u32 %v108, 4294901760
    %v2586 = vsub.f32 %v108, %v2585
    %v2587 = vand.u32 %v2586, 4294901760
    %2588 = vmatprep.subr.mxu0 %v2587
    %v2589 = vand.u32 %v107, 4294901760
    %v2590 = vsub.f32 %v107, %v2589
    %v2591 = vand.u32 %v2590, 4294901760
    %2592 = vmatpush1.msra.mxu0 %v2591
    %v2593 = vand.u32 %v110, 4294901760
    %v2594 = vsub.f32 %v110, %v2593
    %v2595 = vand.u32 %v2594, 4294901760
    %2596 = vmatprep.subr.mxu0 %v2595
    %v2597 = vand.u32 %v109, 4294901760
    %v2598 = vsub.f32 %v109, %v2597
    %v2599 = vand.u32 %v2598, 4294901760
    %2600 = vmatpush1.msra.mxu0 %v2599
    %v2601 = vand.u32 %v112, 4294901760
    %v2602 = vsub.f32 %v112, %v2601
    %v2603 = vand.u32 %v2602, 4294901760
    %2604 = vmatprep.subr.mxu0 %v2603
    %v2605 = vand.u32 %v111, 4294901760
    %v2606 = vsub.f32 %v111, %v2605
    %v2607 = vand.u32 %v2606, 4294901760
    %2608 = vmatpush1.msra.mxu0 %v2607
    %v2609 = vand.u32 %v114, 4294901760
    %v2610 = vsub.f32 %v114, %v2609
    %v2611 = vand.u32 %v2610, 4294901760
    %2612 = vmatprep.subr.mxu0 %v2611
    %v2613 = vand.u32 %v113, 4294901760
    %v2614 = vsub.f32 %v113, %v2613
    %v2615 = vand.u32 %v2614, 4294901760
    %2616 = vmatpush1.msra.mxu0 %v2615
    %v2617 = vand.u32 %v116, 4294901760
    %v2618 = vsub.f32 %v116, %v2617
    %v2619 = vand.u32 %v2618, 4294901760
    %2620 = vmatprep.subr.mxu0 %v2619
    %v2621 = vand.u32 %v115, 4294901760
    %v2622 = vsub.f32 %v115, %v2621
    %v2623 = vand.u32 %v2622, 4294901760
    %2624 = vmatpush1.msra.mxu0 %v2623
    %v2625 = vand.u32 %v1484, 4294901760
    %2626 = vmatprep.mubr.f32.mxu0 %v2625
    %v2627 = vand.u32 %v1483, 4294901760
    %2628 = vmatmul.mubr.f32.gmra.mrb[0].mxu0 %v2627
    %v2629 = vpop.f32.mrb[0].mxu0
    %v2630 = vadd.f32 %v2365, %v2629
    %v2631 = vpop.f32.mrb[0].mxu0
    %v2632 = vadd.f32 %v2367, %v2631
    %2633 = vdwg.mxu0
    %v2634 = vand.u32 %v54, 4294901760
    %2635 = vmatprep.subr.mxu0 %v2634
    %v2636 = vand.u32 %v53, 4294901760
    %2637 = vmatpush1.msra.mxu0 %v2636
    %v2638 = vand.u32 %v56, 4294901760
    %2639 = vmatprep.subr.mxu0 %v2638
    %v2640 = vand.u32 %v55, 4294901760
    %2641 = vmatpush1.msra.mxu0 %v2640
    %v2642 = vand.u32 %v58, 4294901760
    %2643 = vmatprep.subr.mxu0 %v2642
    %v2644 = vand.u32 %v57, 4294901760
    %2645 = vmatpush1.msra.mxu0 %v2644
    %v2646 = vand.u32 %v60, 4294901760
    %2647 = vmatprep.subr.mxu0 %v2646
    %v2648 = vand.u32 %v59, 4294901760
    %2649 = vmatpush1.msra.mxu0 %v2648
    %v2650 = vand.u32 %v62, 4294901760
    %2651 = vmatprep.subr.mxu0 %v2650
    %v2652 = vand.u32 %v61, 4294901760
    %2653 = vmatpush1.msra.mxu0 %v2652
    %v2654 = vand.u32 %v64, 4294901760
    %2655 = vmatprep.subr.mxu0 %v2654
    %v2656 = vand.u32 %v63, 4294901760
    %2657 = vmatpush1.msra.mxu0 %v2656
    %v2658 = vand.u32 %v66, 4294901760
    %2659 = vmatprep.subr.mxu0 %v2658
    %v2660 = vand.u32 %v65, 4294901760
    %2661 = vmatpush1.msra.mxu0 %v2660
    %v2662 = vand.u32 %v68, 4294901760
    %2663 = vmatprep.subr.mxu0 %v2662
    %v2664 = vand.u32 %v67, 4294901760
    %2665 = vmatpush1.msra.mxu0 %v2664
    %v2666 = vand.u32 %v70, 4294901760
    %2667 = vmatprep.subr.mxu0 %v2666
    %v2668 = vand.u32 %v69, 4294901760
    %2669 = vmatpush1.msra.mxu0 %v2668
    %v2670 = vand.u32 %v72, 4294901760
    %2671 = vmatprep.subr.mxu0 %v2670
    %v2672 = vand.u32 %v71, 4294901760
    %2673 = vmatpush1.msra.mxu0 %v2672
    %v2674 = vand.u32 %v74, 4294901760
    %2675 = vmatprep.subr.mxu0 %v2674
    %v2676 = vand.u32 %v73, 4294901760
    %2677 = vmatpush1.msra.mxu0 %v2676
    %v2678 = vand.u32 %v76, 4294901760
    %2679 = vmatprep.subr.mxu0 %v2678
    %v2680 = vand.u32 %v75, 4294901760
    %2681 = vmatpush1.msra.mxu0 %v2680
    %v2682 = vand.u32 %v78, 4294901760
    %2683 = vmatprep.subr.mxu0 %v2682
    %v2684 = vand.u32 %v77, 4294901760
    %2685 = vmatpush1.msra.mxu0 %v2684
    %v2686 = vand.u32 %v80, 4294901760
    %2687 = vmatprep.subr.mxu0 %v2686
    %v2688 = vand.u32 %v79, 4294901760
    %2689 = vmatpush1.msra.mxu0 %v2688
    %v2690 = vand.u32 %v82, 4294901760
    %2691 = vmatprep.subr.mxu0 %v2690
    %v2692 = vand.u32 %v81, 4294901760
    %2693 = vmatpush1.msra.mxu0 %v2692
    %v2694 = vand.u32 %v84, 4294901760
    %2695 = vmatprep.subr.mxu0 %v2694
    %v2696 = vand.u32 %v83, 4294901760
    %2697 = vmatpush1.msra.mxu0 %v2696
    %v2698 = vand.u32 %v86, 4294901760
    %2699 = vmatprep.subr.mxu0 %v2698
    %v2700 = vand.u32 %v85, 4294901760
    %2701 = vmatpush1.msra.mxu0 %v2700
    %v2702 = vand.u32 %v88, 4294901760
    %2703 = vmatprep.subr.mxu0 %v2702
    %v2704 = vand.u32 %v87, 4294901760
    %2705 = vmatpush1.msra.mxu0 %v2704
    %v2706 = vand.u32 %v90, 4294901760
    %2707 = vmatprep.subr.mxu0 %v2706
    %v2708 = vand.u32 %v89, 4294901760
    %2709 = vmatpush1.msra.mxu0 %v2708
    %v2710 = vand.u32 %v92, 4294901760
    %2711 = vmatprep.subr.mxu0 %v2710
    %v2712 = vand.u32 %v91, 4294901760
    %2713 = vmatpush1.msra.mxu0 %v2712
    %v2714 = vand.u32 %v94, 4294901760
    %2715 = vmatprep.subr.mxu0 %v2714
    %v2716 = vand.u32 %v93, 4294901760
    %2717 = vmatpush1.msra.mxu0 %v2716
    %v2718 = vand.u32 %v96, 4294901760
    %2719 = vmatprep.subr.mxu0 %v2718
    %v2720 = vand.u32 %v95, 4294901760
    %2721 = vmatpush1.msra.mxu0 %v2720
    %v2722 = vand.u32 %v98, 4294901760
    %2723 = vmatprep.subr.mxu0 %v2722
    %v2724 = vand.u32 %v97, 4294901760
    %2725 = vmatpush1.msra.mxu0 %v2724
    %v2726 = vand.u32 %v100, 4294901760
    %2727 = vmatprep.subr.mxu0 %v2726
    %v2728 = vand.u32 %v99, 4294901760
    %2729 = vmatpush1.msra.mxu0 %v2728
    %v2730 = vand.u32 %v102, 4294901760
    %2731 = vmatprep.subr.mxu0 %v2730
    %v2732 = vand.u32 %v101, 4294901760
    %2733 = vmatpush1.msra.mxu0 %v2732
    %v2734 = vand.u32 %v104, 4294901760
    %2735 = vmatprep.subr.mxu0 %v2734
    %v2736 = vand.u32 %v103, 4294901760
    %2737 = vmatpush1.msra.mxu0 %v2736
    %v2738 = vand.u32 %v106, 4294901760
    %2739 = vmatprep.subr.mxu0 %v2738
    %v2740 = vand.u32 %v105, 4294901760
    %2741 = vmatpush1.msra.mxu0 %v2740
    %v2742 = vand.u32 %v108, 4294901760
    %2743 = vmatprep.subr.mxu0 %v2742
    %v2744 = vand.u32 %v107, 4294901760
    %2745 = vmatpush1.msra.mxu0 %v2744
    %v2746 = vand.u32 %v110, 4294901760
    %2747 = vmatprep.subr.mxu0 %v2746
    %v2748 = vand.u32 %v109, 4294901760
    %2749 = vmatpush1.msra.mxu0 %v2748
    %v2750 = vand.u32 %v112, 4294901760
    %2751 = vmatprep.subr.mxu0 %v2750
    %v2752 = vand.u32 %v111, 4294901760
    %2753 = vmatpush1.msra.mxu0 %v2752
    %v2754 = vand.u32 %v114, 4294901760
    %2755 = vmatprep.subr.mxu0 %v2754
    %v2756 = vand.u32 %v113, 4294901760
    %2757 = vmatpush1.msra.mxu0 %v2756
    %v2758 = vand.u32 %v116, 4294901760
    %2759 = vmatprep.subr.mxu0 %v2758
    %v2760 = vand.u32 %v115, 4294901760
    %2761 = vmatpush1.msra.mxu0 %v2760
    %v2762 = vand.u32 %v1484, 4294901760
    %2763 = vmatprep.mubr.f32.mxu0 %v2762
    %v2764 = vand.u32 %v1483, 4294901760
    %2765 = vmatmul.mubr.f32.gmra.mrb[0].mxu0 %v2764
    %v2766 = vpop.f32.mrb[0].mxu0
    %v2767 = vadd.f32 %v2630, %v2766
    %v2768 = vpop.f32.mrb[0].mxu0
    %v2769 = vadd.f32 %v2632, %v2768
    %2770 = vdwg.mxu0
    %v2771 = vxor.u32 %v2767, 2147483648
    %v2772 = vxor.u32 %v2769, 2147483648
    %v2773 = vmul.f32 %v2771, 1.442695
    %v2774 = vpow.pop %v2773
    %v2775 = vmul.f32 %v2772, 1.442695
    %v2776 = vpow.pop %v2775
    %v2777 = vadd.f32 %v2774, 1.0
    %v2778 = vadd.f32 %v2776, 1.0
    %v2779 = vrcp.pop %v2777
    %v2780 = vmul.f32 1.0, %v2779
    %v2781 = vrcp.pop %v2778
    %v2782 = vmul.f32 1.0, %v2781
    %v2785 = vcombine.low %v2780, %v2782
    %v2787 = vunpack.c.l.s4 1983009808
    %v2788 = vunpack.c.0.s8 %v2787
    %v2789 = vlaneseq
    %v2790 = vshrl.u32 %v2789, 7
    %v2791 = vsub.s32 %v2788, %v2790
    %v2792 = vrot.slane %v2785, %v2791
    %v2794 = vmul.f32 %v38, %v2792
    %2795 = vst [vmem:[#allocation7] sm:$0xf] %v2794
    %v2796 = vmul.f32 %v41, %v2792
    %2797 = vst [vmem:[#allocation7 + $0x4] sm:$0xf] %v2796
    %v2798 = vmul.f32 %v39, %v2792
    %2799 = vst [vmem:[#allocation7 + $0x8] sm:$0xf] %v2798
    %v2800 = vmul.f32 %v48, %v2792
    %2801 = vst [vmem:[#allocation7 + $0xc] sm:$0xf] %v2800
    // Predicated region
    $region18: #{tpu_custom_call.1} parent=1 // pred_check
      _
    $region19: #{tpu_custom_call.1} parent=1 // pred_check_branch
      %2803 = sbr.rel (0) target = $region21
    $region20: #{tpu_custom_call.1} parent=1 // pred_region
      %s2805 = ssub.s32 256, 256
      %2806 = vsyncadd [#allocation4], %s2805
      %s2808 = sshll.u32 [#allocation7], 4
      %s2809 = int_to_ptr.vmem [resolvable:$true] %s2808
      %2811 = dma.vmem_to_hbm [thread:$0]  %s2809, 256, %s2, [#allocation4]
    $region21: #{tpu_custom_call.1} parent=1 // pred_fallthru
      _
    // Predicated region
    $region22: #{tpu_custom_call.1} parent=1 // pred_check
      _
    $region23: #{tpu_custom_call.1} parent=1 // pred_check_branch
      %2813 = sbr.rel (0) target = $region25
    $region24: #{tpu_custom_call.1} parent=1 // pred_region
      %2814 = dma.done [#allocation4], 256
    $region25: #{tpu_custom_call.1} parent=1 // pred_fallthru
      _
    %2815 = vsyncpa [#allocation3], 1
    %2816 = vsyncpa [#allocation6], 1
    %2817 = vsyncpa [#allocation4], 1

</llo_original>
